<compile_context>
chip_gen: v5e
topology: v5e:2x2
jax: 0.10.0
libtpu: 0.0.40
codegen_flags: <defaults>
</compile_context>

<pallas_src>
import functools
import math

import jax
import jax.numpy as jnp
from jax import lax
from jax.experimental import pallas as pl
from jax.experimental.pallas import tpu as pltpu


# ----------------------------------------------------------------------------
# Pallas kernels
# ----------------------------------------------------------------------------
def _gemm_bias_kernel(a_ref, w_ref, b_ref, o_ref, *, relu):
    # (tm, K) @ (K, N) + (1, N) -> (tm, N).  MXU operands in bf16, f32 accumulate,
    # f32 epilogue (bias + ReLU) so the VPU path stays f32 (v5e-safe).
    a = a_ref[...].astype(jnp.bfloat16)
    acc = jnp.dot(a, w_ref[...], preferred_element_type=jnp.float32)
    acc = acc + b_ref[...]
    if relu:
        acc = jnp.maximum(acc, 0.0)
    o_ref[...] = acc.astype(o_ref.dtype)


def matmul_bias(a, w_bf16, b, *, relu=False, tm=128):
    """a (M,K) f32 @ w (K,N) bf16 + b (N,) f32 -> (M,N) f32, tiled over M.

    No wrapper-side pad / cast / slice: the ragged last M-block is masked by
    Pallas and the bf16 cast of A happens inside the kernel.
    """
    M, K = a.shape
    K2, N = w_bf16.shape
    assert K == K2
    tm_eff = min(tm, M)                       # == M (full dim) or a multiple of 8
    grid = (pl.cdiv(M, tm_eff),)
    return pl.pallas_call(
        functools.partial(_gemm_bias_kernel, relu=relu),
        out_shape=jax.ShapeDtypeStruct((M, N), jnp.float32),
        grid=grid,
        in_specs=[
            pl.BlockSpec((tm_eff, K), lambda i: (i, 0)),
            pl.BlockSpec((K, N), lambda i: (0, 0)),
            pl.BlockSpec((1, N), lambda i: (0, 0)),
        ],
        out_specs=pl.BlockSpec((tm_eff, N), lambda i: (i, 0)),
        compiler_params=pltpu.CompilerParams(dimension_semantics=("parallel",)),
    )(a, w_bf16, b.reshape(1, N))


def _roi_head_kernel(x_ref, w5_ref, b5_ref, wh_ref, bh_ref, o_ref, *, tr, s_pad, s_valid):
    # Fused Res5ROIHeads tail for a tile of `tr` ROIs:
    #   res5 1x1 conv (affine_rcnn folded) + ReLU
    #   -> masked spatial mean pool (only the first s_valid of s_pad samples count)
    #   -> merged cls_score / bbox_pred GEMM (lane-dense 128-wide output).
    x = x_ref[...].astype(jnp.bfloat16)                               # (tr*s_pad, C)
    h = jnp.dot(x, w5_ref[...], preferred_element_type=jnp.float32) + b5_ref[...]
    h = jnp.maximum(h, 0.0)                                           # (tr*s_pad, 64) f32
    # Block-diagonal averaging matrix (tr, tr*s_pad): mean over each ROI's valid samples.
    roi = lax.broadcasted_iota(jnp.int32, (tr, tr * s_pad), 0)
    col = lax.broadcasted_iota(jnp.int32, (tr, tr * s_pad), 1)
    local = col - roi * s_pad
    w_avg = jnp.where((local >= 0) & (local < s_valid), 1.0 / s_valid, 0.0)
    feat = jnp.dot(w_avg, h, preferred_element_type=jnp.float32)      # (tr, 64) f32
    out = jnp.dot(feat.astype(jnp.bfloat16), wh_ref[...],
                  preferred_element_type=jnp.float32) + bh_ref[...]   # (tr, 128)
    o_ref[...] = out.astype(o_ref.dtype)


def roi_head_fused(pooled, w5_bf16, b5, wh_bf16, bh, *, s_valid, tr=8):
    """pooled (R, s_pad, C) -> merged [cls_logits | bbox_deltas | zero-pad] (R, N_out)."""
    R, s_pad, C = pooled.shape
    n5 = w5_bf16.shape[1]
    n_out = wh_bf16.shape[1]
    tr_eff = min(tr, R)
    grid = (pl.cdiv(R, tr_eff),)
    pooled_flat = pooled.reshape(R * s_pad, C)
    return pl.pallas_call(
        functools.partial(_roi_head_kernel, tr=tr_eff, s_pad=s_pad, s_valid=s_valid),
        out_shape=jax.ShapeDtypeStruct((R, n_out), jnp.float32),
        grid=grid,
        in_specs=[
            pl.BlockSpec((tr_eff * s_pad, C), lambda i: (i, 0)),
            pl.BlockSpec((C, n5), lambda i: (0, 0)),
            pl.BlockSpec((1, n5), lambda i: (0, 0)),
            pl.BlockSpec((n5, n_out), lambda i: (0, 0)),
            pl.BlockSpec((1, n_out), lambda i: (0, 0)),
        ],
        out_specs=pl.BlockSpec((tr_eff, n_out), lambda i: (i, 0)),
        compiler_params=pltpu.CompilerParams(dimension_semantics=("parallel",)),
    )(pooled_flat, w5_bf16, b5.reshape(1, n5), wh_bf16, bh.reshape(1, n_out))


# ----------------------------------------------------------------------------
# Glue: im2col convolution built on the Pallas GEMM
# ----------------------------------------------------------------------------
def conv2d(x_nhwc, w_mat_bf16, b, *, kh, kw, stride=1, padding=0, relu=False, pad_value=None):
    """x: (N,H,W,Cin); w_mat_bf16: pre-reshaped (kh*kw*Cin, Cout) bf16; b: (Cout,).

    `pad_value` is a per-input-channel border value used to keep affine/normalize
    folds exact at the zero-padded border of the original graph.
    """
    N, H, W, C = x_nhwc.shape
    Cout = w_mat_bf16.shape[1]
    if padding > 0:
        Hp, Wp = H + 2 * padding, W + 2 * padding
        if pad_value is None:
            xp = jnp.pad(x_nhwc, ((0, 0), (padding, padding), (padding, padding), (0, 0)))
        else:
            xp = jnp.broadcast_to(pad_value.reshape(1, 1, 1, C).astype(x_nhwc.dtype),
                                  (N, Hp, Wp, C))
            xp = xp.at[:, padding:padding + H, padding:padding + W, :].set(x_nhwc)
    else:
        xp = x_nhwc
    Ho = (H + 2 * padding - kh) // stride + 1
    Wo = (W + 2 * padding - kw) // stride + 1
    # TODO(synk): im2col patches are still materialized by XLA (kh*kw x blowup); fusing
    #             the tap loop into the GEMM kernel is the next step for large inputs.
    patches = [xp[:, i:i + stride * Ho:stride, j:j + stride * Wo:stride, :]
               for i in range(kh) for j in range(kw)]
    a = jnp.concatenate(patches, axis=-1).reshape(N * Ho * Wo, kh * kw * C)
    out = matmul_bias(a, w_mat_bf16, b, relu=relu)
    return out.reshape(N, Ho, Wo, Cout)


# ----------------------------------------------------------------------------
# Init-time folding helpers (zero per-forward cost)
# ----------------------------------------------------------------------------
def fold_affine_into_conv(w, b, scale, shift):
    """conv(scale*x + shift) == conv'(x) with w' = w*scale (per Cin) and
    b' = b + sum_taps w . shift.  Exact at the border too when the conv input is
    padded with pad_value = -shift/scale (so the folded affine of the pad is 0)."""
    w_f = w * scale.reshape(1, 1, -1, 1)
    b_f = b + jnp.einsum("ijco,c->o", w, shift)
    pad_value = -shift / scale
    return w_f, b_f, pad_value


def pad_cols(w, b, n_to):
    k, n = w.shape
    return jnp.pad(w, ((0, 0), (0, n_to - n))), jnp.pad(b, (0, n_to - n))


# ----------------------------------------------------------------------------
# Glue: anchors, proposal decode, ROI sampling
# ----------------------------------------------------------------------------
_SCALE_CLAMP = math.log(1000.0 / 16.0)   # detectron2 Box2BoxTransform scale_clamp


def make_anchors(Hf, Wf, stride, sizes):
    ys = (jnp.arange(Hf, dtype=jnp.float32) + 0.5) * stride
    xs = (jnp.arange(Wf, dtype=jnp.float32) + 0.5) * stride
    cy, cx = jnp.meshgrid(ys, xs, indexing="ij")
    per_size = []
    for s in sizes:
        h = float(s) / 2.0
        per_size.append(jnp.stack([cx - h, cy - h, cx + h, cy + h], axis=-1))
    return jnp.stack(per_size, axis=2)                    # (Hf, Wf, A, 4)


def apply_deltas(anchors, deltas):
    w = anchors[..., 2] - anchors[..., 0]
    h = anchors[..., 3] - anchors[..., 1]
    cx = anchors[..., 0] + 0.5 * w
    cy = anchors[..., 1] + 0.5 * h
    dw = jnp.minimum(deltas[..., 2], _SCALE_CLAMP)
    dh = jnp.minimum(deltas[..., 3], _SCALE_CLAMP)
    ncx = cx + deltas[..., 0] * w
    ncy = cy + deltas[..., 1] * h
    nw = w * jnp.exp(dw)
    nh = h * jnp.exp(dh)
    return jnp.stack([ncx - 0.5 * nw, ncy - 0.5 * nh, ncx + 0.5 * nw, ncy + 0.5 * nh], axis=-1)


def roi_pool_nearest(feat, boxes, batch_idx, *, out_size, spatial_scale, s_pad):
    """feat: (N,Hf,Wf,C); boxes: (R,4). Returns (R, s_pad, C); samples >= out_size**2
    are padding and are masked inside the fused ROI-head kernel."""
    # TODO(synk): nearest-neighbour XLA gather, not bilinear ROIAlign and not yet a
    #             scalar-prefetch Pallas gather kernel.
    R = boxes.shape[0]
    Hf, Wf = feat.shape[1], feat.shape[2]
    x1, y1, x2, y2 = (boxes[:, i] * spatial_scale for i in range(4))
    t = (jnp.arange(out_size, dtype=jnp.float32) + 0.5) / out_size
    ys = y1[:, None] + t[None, :] * (y2 - y1)[:, None]            # (R, S)
    xs = x1[:, None] + t[None, :] * (x2 - x1)[:, None]
    yi = jnp.clip(jnp.round(ys).astype(jnp.int32), 0, Hf - 1)
    xi = jnp.clip(jnp.round(xs).astype(jnp.int32), 0, Wf - 1)
    S = out_size
    yg = jnp.broadcast_to(yi[:, :, None], (R, S, S)).reshape(R, S * S)
    xg = jnp.broadcast_to(xi[:, None, :], (R, S, S)).reshape(R, S * S)
    pad_n = s_pad - S * S
    yg = jnp.pad(yg, ((0, 0), (0, pad_n)))
    xg = jnp.pad(xg, ((0, 0), (0, pad_n)))
    return feat[batch_idx[:, None], yg, xg, :]                    # (R, s_pad, C)


# ----------------------------------------------------------------------------
# Model: deterministic synthetic parameters + forward
# ----------------------------------------------------------------------------
class GeneralizedRCNNPallas:
    NUM_CLASSES = 5
    NUM_ANCHORS = 3
    ANCHOR_SIZES = (8.0, 16.0, 32.0)
    TOPK_PROPOSALS = 8
    FEAT_STRIDE = 4          # backbone reduces 32x32 -> 8x8
    ROI_OUT = 7
    ROI_S_PAD = 56           # 7*7 = 49 samples padded to a sublane multiple
    HEAD_PAD = 128           # lane-dense width for the tiny prediction heads

    def __init__(self, key):
        ks = jax.random.split(key, 16)
        f32, bf16 = jnp.float32, jnp.bfloat16
        A = self.NUM_ANCHORS
        # pixel normalization (cfg.MODEL.PIXEL_MEAN / PIXEL_STD, BGR convention)
        self.pixel_mean = jnp.array([103.530, 116.280, 123.675], f32)
        self.pixel_std = jnp.array([57.375, 57.120, 58.395], f32)
        s = 0.05
        # raw synthetic parameters (same distributions as before)
        w_conv1 = s * jax.random.normal(ks[0], (3, 3, 3, 16), f32)
        b_conv1 = jnp.zeros((16,), f32)
        w_conv2 = s * jax.random.normal(ks[1], (3, 3, 16, 32), f32)
        b_conv2 = jnp.zeros((32,), f32)
        affine_rpn_w = jnp.ones((32,), f32) + 0.01 * jax.random.normal(ks[2], (32,), f32)
        affine_rpn_b = 0.01 * jax.random.normal(ks[3], (32,), f32)
        affine_rcnn_w = jnp.ones((32,), f32) + 0.01 * jax.random.normal(ks[4], (32,), f32)
        affine_rcnn_b = 0.01 * jax.random.normal(ks[5], (32,), f32)
        w_rpn = s * jax.random.normal(ks[6], (3, 3, 32, 32), f32)
        b_rpn = jnp.zeros((32,), f32)
        w_obj = s * jax.random.normal(ks[7], (1, 1, 32, A), f32)
        b_obj = jnp.zeros((A,), f32)
        w_dlt = s * jax.random.normal(ks[8], (1, 1, 32, 4 * A), f32)
        b_dlt = jnp.zeros((4 * A,), f32)
        w_res5 = s * jax.random.normal(ks[9], (1, 1, 32, 64), f32)
        b_res5 = jnp.zeros((64,), f32)
        w_cls = s * jax.random.normal(ks[10], (64, self.NUM_CLASSES + 1), f32)
        b_cls = jnp.zeros((self.NUM_CLASSES + 1,), f32)
        w_box = s * jax.random.normal(ks[11], (64, 4 * self.NUM_CLASSES), f32)
        b_box = jnp.zeros((4 * self.NUM_CLASSES,), f32)

        # --- one-time folds / merges (all at init, nothing per forward) ---------
        # 1. pixel normalize folded into conv1 (border kept exact via pad = pixel_mean)
        w1f, b1f, pad1 = fold_affine_into_conv(
            w_conv1, b_conv1, 1.0 / self.pixel_std, -self.pixel_mean / self.pixel_std)
        self.w_conv1 = w1f.reshape(-1, 16).astype(bf16)
        self.b_conv1 = b1f
        self.conv1_pad = pad1                               # == pixel_mean
        # 2. backbone conv2 (unchanged)
        self.w_conv2 = w_conv2.reshape(-1, 32).astype(bf16)
        self.b_conv2 = b_conv2
        # 3. affine_rpn (decouple head) folded into the RPN 3x3 conv
        wrf, brf, padr = fold_affine_into_conv(w_rpn, b_rpn, affine_rpn_w, affine_rpn_b)
        self.w_rpn = wrf.reshape(-1, 32).astype(bf16)
        self.b_rpn = brf
        self.rpn_pad = padr
        # 4. objectness + anchor-delta 1x1 convs merged into one lane-dense GEMM
        w_od = jnp.concatenate([w_obj.reshape(32, A), w_dlt.reshape(32, 4 * A)], axis=1)
        b_od = jnp.concatenate([b_obj, b_dlt])
        w_od, b_od = pad_cols(w_od, b_od, self.HEAD_PAD)
        self.w_objdlt = w_od.astype(bf16)
        self.b_objdlt = b_od
        # 5. affine_rcnn folded into res5 (1x1); cls_score + bbox_pred merged & padded
        w5 = w_res5.reshape(32, 64)
        self.w_res5 = (affine_rcnn_w[:, None] * w5).astype(bf16)
        self.b_res5 = b_res5 + affine_rcnn_b @ w5
        w_heads = jnp.concatenate([w_cls, w_box], axis=1)            # (64, 26)
        b_heads = jnp.concatenate([b_cls, b_box])
        w_heads, b_heads = pad_cols(w_heads, b_heads, self.HEAD_PAD)
        self.w_heads = w_heads.astype(bf16)
        self.b_heads = b_heads

    # -- backbone (preprocess_image is folded into conv1) ----------------------
    def backbone(self, images_nchw):
        x = jnp.transpose(images_nchw.astype(jnp.float32), (0, 2, 3, 1))   # NCHW -> NHWC
        h = conv2d(x, self.w_conv1, self.b_conv1, kh=3, kw=3, stride=2, padding=1,
                   relu=True, pad_value=self.conv1_pad)
        h = conv2d(h, self.w_conv2, self.b_conv2, kh=3, kw=3, stride=2, padding=1, relu=True)
        return {"res4": h}                                  # (N, H/4, W/4, 32)

    # -- proposal generator (RPN, affine_rpn pre-folded) ------------------------
    def proposal_generator(self, res4, img_hw):
        N, Hf, Wf, C = res4.shape
        A = self.NUM_ANCHORS
        t = conv2d(res4, self.w_rpn, self.b_rpn, kh=3, kw=3, stride=1, padding=1,
                   relu=True, pad_value=self.rpn_pad)
        od = matmul_bias(t.reshape(N * Hf * Wf, C), self.w_objdlt, self.b_objdlt)  # (M,128)
        obj_flat = od[:, :A].reshape(N, Hf * Wf * A)
        dlt_flat = od[:, A:5 * A].reshape(N, Hf * Wf * A, 4)
        anchors = make_anchors(Hf, Wf, self.FEAT_STRIDE, self.ANCHOR_SIZES)
        anc_flat = anchors.reshape(Hf * Wf * A, 4)
        scores, idx = lax.top_k(obj_flat, self.TOPK_PROPOSALS)                     # (N,K)
        sel_dlt = jnp.take_along_axis(dlt_flat, idx[:, :, None], axis=1)           # (N,K,4)
        sel_anc = anc_flat[idx]                                                    # (N,K,4)
        boxes = apply_deltas(sel_anc, sel_dlt)
        H_img, W_img = img_hw
        boxes = jnp.stack(
            [jnp.clip(boxes[..., 0], 0.0, W_img), jnp.clip(boxes[..., 1], 0.0, H_img),
             jnp.clip(boxes[..., 2], 0.0, W_img), jnp.clip(boxes[..., 3], 0.0, H_img)],
            axis=-1)
        # TODO(synk): RPN NMS and proposal losses not implemented.
        return boxes, scores

    # -- ROI heads (Res5ROIHeads-style, affine_rcnn pre-folded) -----------------
    def roi_heads(self, res4, proposal_boxes):
        N, K = proposal_boxes.shape[0], proposal_boxes.shape[1]
        R, S = N * K, self.ROI_OUT
        batch_idx = jnp.repeat(jnp.arange(N), K)
        boxes_flat = proposal_boxes.reshape(R, 4)
        pooled = roi_pool_nearest(res4, boxes_flat, batch_idx, out_size=S,
                                  spatial_scale=1.0 / self.FEAT_STRIDE,
                                  s_pad=self.ROI_S_PAD)                    # (R, 56, 32)
        out = roi_head_fused(pooled, self.w_res5, self.b_res5,
                             self.w_heads, self.b_heads, s_valid=S * S)    # (R, 128)
        nc = self.NUM_CLASSES
        cls_logits = out[:, :nc + 1]
        box_deltas = out[:, nc + 1:nc + 1 + 4 * nc]
        scores = jax.nn.softmax(cls_logits, axis=-1)
        return scores.reshape(N, K, -1), box_deltas.reshape(N, K, -1)

    # -- forward (inference path; training losses are TODO) ---------------------
    def forward(self, images_nchw):
        N, C, H, W = images_nchw.shape
        features = self.backbone(images_nchw)
        res4 = features["res4"]
        proposal_boxes, proposal_scores = self.proposal_generator(res4, (H, W))
        scores, box_deltas = self.roi_heads(res4, proposal_boxes)
        # TODO(synk): detector_postprocess (per-class NMS + rescale to output size) omitted.
        return {
            "proposal_boxes": proposal_boxes,     # (N, K, 4)
            "proposal_scores": proposal_scores,   # (N, K)
            "scores": scores,                     # (N, K, num_classes+1)
            "pred_deltas": box_deltas,            # (N, K, 4*num_classes)
        }


if __name__ == "__main__":
    key = jax.random.PRNGKey(0)
    k_model, k_img = jax.random.split(key)
    model = GeneralizedRCNNPallas(k_model)
    # batched_inputs: 2 images, 3 channels, 32x32 (NCHW, like detectron2 "image" entries)
    x = jax.random.uniform(k_img, (2, 3, 32, 32), jnp.float32, minval=0.0, maxval=255.0)
    fwd = jax.jit(model.forward)
    out = fwd(x)
    out = jax.tree_util.tree_map(jax.block_until_ready, out)
    assert out["proposal_boxes"].shape == (2, 8, 4)
    assert out["proposal_scores"].shape == (2, 8)
    assert out["scores"].shape == (2, 8, 6)
    assert out["pred_deltas"].shape == (2, 8, 20)
    assert all(bool(jnp.all(jnp.isfinite(v))) for v in jax.tree_util.tree_leaves(out))
    print("KERNEL_OK")
</pallas_src>

<mosaic_0001>
module attributes {stable_mosaic.version = 11 : i64} {
  func.func @_gemm_bias_kernel(%arg0: i32, %arg1: memref<128x27xf32, #tpu.memory_space<vmem>>, %arg2: memref<27x16xbf16, #tpu.memory_space<vmem>>, %arg3: memref<1x16xf32, #tpu.memory_space<vmem>>, %arg4: memref<128x16xf32, #tpu.memory_space<vmem>>) attributes {dimension_semantics = [#tpu.dimension_semantics<parallel>], iteration_bounds = array<i64: 4>, scalar_prefetch = 0 : i64, scratch_operands = 0 : i64, tpu.core_type = #tpu.core_type<tc>, window_params = [{transform_indices = @transform_0, window_bounds = array<i64: 128, 27>}, {pipeline_mode = #tpu.pipeline_mode<synchronous>, transform_indices = @transform_1, window_bounds = array<i64: 27, 16>}, {pipeline_mode = #tpu.pipeline_mode<synchronous>, transform_indices = @transform_2, window_bounds = array<i64: 1, 16>}, {transform_indices = @transform_3, window_bounds = array<i64: 128, 16>}]} {
    %c0 = arith.constant 0 : index
    %c0_0 = arith.constant 0 : index
    %0 = vector.load %arg1[%c0, %c0_0] : memref<128x27xf32, #tpu.memory_space<vmem>>, vector<128x27xf32>
    %1 = arith.truncf %0 : vector<128x27xf32> to vector<128x27xbf16>
    %c0_1 = arith.constant 0 : index
    %c0_2 = arith.constant 0 : index
    %2 = vector.load %arg2[%c0_1, %c0_2] : memref<27x16xbf16, #tpu.memory_space<vmem>>, vector<27x16xbf16>
    %cst = arith.constant dense<0.000000e+00> : vector<128x16xf32>
    %3 = tpu.matmul %1, %2, %cst {dimension_numbers = #tpu.dot_dimension_numbers<[1], [0], [0], [1], [0, 0, 1, 1], [], []>} : vector<128x27xbf16>, vector<27x16xbf16>, vector<128x16xf32> -> vector<128x16xf32>
    %c0_3 = arith.constant 0 : index
    %c0_4 = arith.constant 0 : index
    %4 = vector.load %arg3[%c0_3, %c0_4] : memref<1x16xf32, #tpu.memory_space<vmem>>, vector<1x16xf32>
    %5 = vector.broadcast %4 : vector<1x16xf32> to vector<128x16xf32>
    %6 = arith.addf %3, %5 : vector<128x16xf32>
    %cst_5 = arith.constant 0.000000e+00 : f32
    %7 = vector.broadcast %cst_5 : f32 to vector<128x16xf32>
    %8 = arith.maximumf %6, %7 : vector<128x16xf32>
    %c0_6 = arith.constant 0 : index
    %c0_7 = arith.constant 0 : index
    %9 = vector.load %arg4[%c0_6, %c0_7] : memref<128x16xf32, #tpu.memory_space<vmem>>, vector<128x16xf32>
    tpu.vector_store %arg4[%c0_6, %c0_7], %8 {strides = array<i32>} : memref<128x16xf32, #tpu.memory_space<vmem>>, vector<128x16xf32>,
    return
  }
  func.func @transform_0(%arg0: i32) -> (i32, i32) {
    %c0_i32 = arith.constant 0 : i32
    %c0_i32_0 = arith.constant 0 : i32
    return %arg0, %c0_i32 : i32, i32
  }
  func.func @transform_1(%arg0: i32) -> (i32, i32) {
    %c0_i32 = arith.constant 0 : i32
    %c0_i32_0 = arith.constant 0 : i32
    %c0_i32_1 = arith.constant 0 : i32
    return %c0_i32, %c0_i32_0 : i32, i32
  }
  func.func @transform_2(%arg0: i32) -> (i32, i32) {
    %c0_i32 = arith.constant 0 : i32
    %c0_i32_0 = arith.constant 0 : i32
    %c0_i32_1 = arith.constant 0 : i32
    return %c0_i32, %c0_i32_0 : i32, i32
  }
  func.func @transform_3(%arg0: i32) -> (i32, i32) {
    %c0_i32 = arith.constant 0 : i32
    %c0_i32_0 = arith.constant 0 : i32
    return %arg0, %c0_i32 : i32, i32
  }
}

module attributes {stable_mosaic.version = 11 : i64} {
  func.func @_gemm_bias_kernel(%arg0: i32, %arg1: memref<128x144xf32, #tpu.memory_space<vmem>>, %arg2: memref<144x32xbf16, #tpu.memory_space<vmem>>, %arg3: memref<1x32xf32, #tpu.memory_space<vmem>>, %arg4: memref<128x32xf32, #tpu.memory_space<vmem>>) attributes {dimension_semantics = [#tpu.dimension_semantics<parallel>], iteration_bounds = array<i64: 1>, scalar_prefetch = 0 : i64, scratch_operands = 0 : i64, tpu.core_type = #tpu.core_type<tc>, window_params = [{transform_indices = @transform_0, window_bounds = array<i64: 128, 144>}, {pipeline_mode = #tpu.pipeline_mode<synchronous>, transform_indices = @transform_1, window_bounds = array<i64: 144, 32>}, {pipeline_mode = #tpu.pipeline_mode<synchronous>, transform_indices = @transform_2, window_bounds = array<i64: 1, 32>}, {transform_indices = @transform_3, window_bounds = array<i64: 128, 32>}]} {
    %c0 = arith.constant 0 : index
    %c0_0 = arith.constant 0 : index
    %0 = vector.load %arg1[%c0, %c0_0] : memref<128x144xf32, #tpu.memory_space<vmem>>, vector<128x144xf32>
    %1 = arith.truncf %0 : vector<128x144xf32> to vector<128x144xbf16>
    %c0_1 = arith.constant 0 : index
    %c0_2 = arith.constant 0 : index
    %2 = vector.load %arg2[%c0_1, %c0_2] : memref<144x32xbf16, #tpu.memory_space<vmem>>, vector<144x32xbf16>
    %cst = arith.constant dense<0.000000e+00> : vector<128x32xf32>
    %3 = tpu.matmul %1, %2, %cst {dimension_numbers = #tpu.dot_dimension_numbers<[1], [0], [0], [1], [0, 0, 1, 1], [], []>} : vector<128x144xbf16>, vector<144x32xbf16>, vector<128x32xf32> -> vector<128x32xf32>
    %c0_3 = arith.constant 0 : index
    %c0_4 = arith.constant 0 : index
    %4 = vector.load %arg3[%c0_3, %c0_4] : memref<1x32xf32, #tpu.memory_space<vmem>>, vector<1x32xf32>
    %5 = vector.broadcast %4 : vector<1x32xf32> to vector<128x32xf32>
    %6 = arith.addf %3, %5 : vector<128x32xf32>
    %cst_5 = arith.constant 0.000000e+00 : f32
    %7 = vector.broadcast %cst_5 : f32 to vector<128x32xf32>
    %8 = arith.maximumf %6, %7 : vector<128x32xf32>
    %c0_6 = arith.constant 0 : index
    %c0_7 = arith.constant 0 : index
    %9 = vector.load %arg4[%c0_6, %c0_7] : memref<128x32xf32, #tpu.memory_space<vmem>>, vector<128x32xf32>
    tpu.vector_store %arg4[%c0_6, %c0_7], %8 {strides = array<i32>} : memref<128x32xf32, #tpu.memory_space<vmem>>, vector<128x32xf32>,
    return
  }
  func.func @transform_0(%arg0: i32) -> (i32, i32) {
    %c0_i32 = arith.constant 0 : i32
    %c0_i32_0 = arith.constant 0 : i32
    return %arg0, %c0_i32 : i32, i32
  }
  func.func @transform_1(%arg0: i32) -> (i32, i32) {
    %c0_i32 = arith.constant 0 : i32
    %c0_i32_0 = arith.constant 0 : i32
    %c0_i32_1 = arith.constant 0 : i32
    return %c0_i32, %c0_i32_0 : i32, i32
  }
  func.func @transform_2(%arg0: i32) -> (i32, i32) {
    %c0_i32 = arith.constant 0 : i32
    %c0_i32_0 = arith.constant 0 : i32
    %c0_i32_1 = arith.constant 0 : i32
    return %c0_i32, %c0_i32_0 : i32, i32
  }
  func.func @transform_3(%arg0: i32) -> (i32, i32) {
    %c0_i32 = arith.constant 0 : i32
    %c0_i32_0 = arith.constant 0 : i32
    return %arg0, %c0_i32 : i32, i32
  }
}

module attributes {stable_mosaic.version = 11 : i64} {
  func.func @_gemm_bias_kernel(%arg0: i32, %arg1: memref<128x288xf32, #tpu.memory_space<vmem>>, %arg2: memref<288x32xbf16, #tpu.memory_space<vmem>>, %arg3: memref<1x32xf32, #tpu.memory_space<vmem>>, %arg4: memref<128x32xf32, #tpu.memory_space<vmem>>) attributes {dimension_semantics = [#tpu.dimension_semantics<parallel>], iteration_bounds = array<i64: 1>, scalar_prefetch = 0 : i64, scratch_operands = 0 : i64, tpu.core_type = #tpu.core_type<tc>, window_params = [{transform_indices = @transform_0, window_bounds = array<i64: 128, 288>}, {pipeline_mode = #tpu.pipeline_mode<synchronous>, transform_indices = @transform_1, window_bounds = array<i64: 288, 32>}, {pipeline_mode = #tpu.pipeline_mode<synchronous>, transform_indices = @transform_2, window_bounds = array<i64: 1, 32>}, {transform_indices = @transform_3, window_bounds = array<i64: 128, 32>}]} {
    %c0 = arith.constant 0 : index
    %c0_0 = arith.constant 0 : index
    %0 = vector.load %arg1[%c0, %c0_0] : memref<128x288xf32, #tpu.memory_space<vmem>>, vector<128x288xf32>
    %1 = arith.truncf %0 : vector<128x288xf32> to vector<128x288xbf16>
    %c0_1 = arith.constant 0 : index
    %c0_2 = arith.constant 0 : index
    %2 = vector.load %arg2[%c0_1, %c0_2] : memref<288x32xbf16, #tpu.memory_space<vmem>>, vector<288x32xbf16>
    %cst = arith.constant dense<0.000000e+00> : vector<128x32xf32>
    %3 = tpu.matmul %1, %2, %cst {dimension_numbers = #tpu.dot_dimension_numbers<[1], [0], [0], [1], [0, 0, 1, 1], [], []>} : vector<128x288xbf16>, vector<288x32xbf16>, vector<128x32xf32> -> vector<128x32xf32>
    %c0_3 = arith.constant 0 : index
    %c0_4 = arith.constant 0 : index
    %4 = vector.load %arg3[%c0_3, %c0_4] : memref<1x32xf32, #tpu.memory_space<vmem>>, vector<1x32xf32>
    %5 = vector.broadcast %4 : vector<1x32xf32> to vector<128x32xf32>
    %6 = arith.addf %3, %5 : vector<128x32xf32>
    %cst_5 = arith.constant 0.000000e+00 : f32
    %7 = vector.broadcast %cst_5 : f32 to vector<128x32xf32>
    %8 = arith.maximumf %6, %7 : vector<128x32xf32>
    %c0_6 = arith.constant 0 : index
    %c0_7 = arith.constant 0 : index
    %9 = vector.load %arg4[%c0_6, %c0_7] : memref<128x32xf32, #tpu.memory_space<vmem>>, vector<128x32xf32>
    tpu.vector_store %arg4[%c0_6, %c0_7], %8 {strides = array<i32>} : memref<128x32xf32, #tpu.memory_space<vmem>>, vector<128x32xf32>,
    return
  }
  func.func @transform_0(%arg0: i32) -> (i32, i32) {
    %c0_i32 = arith.constant 0 : i32
    %c0_i32_0 = arith.constant 0 : i32
    return %arg0, %c0_i32 : i32, i32
  }
  func.func @transform_1(%arg0: i32) -> (i32, i32) {
    %c0_i32 = arith.constant 0 : i32
    %c0_i32_0 = arith.constant 0 : i32
    %c0_i32_1 = arith.constant 0 : i32
    return %c0_i32, %c0_i32_0 : i32, i32
  }
  func.func @transform_2(%arg0: i32) -> (i32, i32) {
    %c0_i32 = arith.constant 0 : i32
    %c0_i32_0 = arith.constant 0 : i32
    %c0_i32_1 = arith.constant 0 : i32
    return %c0_i32, %c0_i32_0 : i32, i32
  }
  func.func @transform_3(%arg0: i32) -> (i32, i32) {
    %c0_i32 = arith.constant 0 : i32
    %c0_i32_0 = arith.constant 0 : i32
    return %arg0, %c0_i32 : i32, i32
  }
}

module attributes {stable_mosaic.version = 11 : i64} {
  func.func @_gemm_bias_kernel(%arg0: i32, %arg1: memref<128x32xf32, #tpu.memory_space<vmem>>, %arg2: memref<32x128xbf16, #tpu.memory_space<vmem>>, %arg3: memref<1x128xf32, #tpu.memory_space<vmem>>, %arg4: memref<128x128xf32, #tpu.memory_space<vmem>>) attributes {dimension_semantics = [#tpu.dimension_semantics<parallel>], iteration_bounds = array<i64: 1>, scalar_prefetch = 0 : i64, scratch_operands = 0 : i64, tpu.core_type = #tpu.core_type<tc>, window_params = [{transform_indices = @transform_0, window_bounds = array<i64: 128, 32>}, {pipeline_mode = #tpu.pipeline_mode<synchronous>, transform_indices = @transform_1, window_bounds = array<i64: 32, 128>}, {pipeline_mode = #tpu.pipeline_mode<synchronous>, transform_indices = @transform_2, window_bounds = array<i64: 1, 128>}, {transform_indices = @transform_3, window_bounds = array<i64: 128, 128>}]} {
    %c0 = arith.constant 0 : index
    %c0_0 = arith.constant 0 : index
    %0 = vector.load %arg1[%c0, %c0_0] : memref<128x32xf32, #tpu.memory_space<vmem>>, vector<128x32xf32>
    %1 = arith.truncf %0 : vector<128x32xf32> to vector<128x32xbf16>
    %c0_1 = arith.constant 0 : index
    %c0_2 = arith.constant 0 : index
    %2 = vector.load %arg2[%c0_1, %c0_2] : memref<32x128xbf16, #tpu.memory_space<vmem>>, vector<32x128xbf16>
    %cst = arith.constant dense<0.000000e+00> : vector<128x128xf32>
    %3 = tpu.matmul %1, %2, %cst {dimension_numbers = #tpu.dot_dimension_numbers<[1], [0], [0], [1], [0, 0, 1, 1], [], []>} : vector<128x32xbf16>, vector<32x128xbf16>, vector<128x128xf32> -> vector<128x128xf32>
    %c0_3 = arith.constant 0 : index
    %c0_4 = arith.constant 0 : index
    %4 = vector.load %arg3[%c0_3, %c0_4] : memref<1x128xf32, #tpu.memory_space<vmem>>, vector<1x128xf32>
    %5 = vector.broadcast %4 : vector<1x128xf32> to vector<128x128xf32>
    %6 = arith.addf %3, %5 : vector<128x128xf32>
    %c0_5 = arith.constant 0 : index
    %c0_6 = arith.constant 0 : index
    %7 = vector.load %arg4[%c0_5, %c0_6] : memref<128x128xf32, #tpu.memory_space<vmem>>, vector<128x128xf32>
    tpu.vector_store %arg4[%c0_5, %c0_6], %6 {strides = array<i32>} : memref<128x128xf32, #tpu.memory_space<vmem>>, vector<128x128xf32>,
    return
  }
  func.func @transform_0(%arg0: i32) -> (i32, i32) {
    %c0_i32 = arith.constant 0 : i32
    %c0_i32_0 = arith.constant 0 : i32
    return %arg0, %c0_i32 : i32, i32
  }
  func.func @transform_1(%arg0: i32) -> (i32, i32) {
    %c0_i32 = arith.constant 0 : i32
    %c0_i32_0 = arith.constant 0 : i32
    %c0_i32_1 = arith.constant 0 : i32
    return %c0_i32, %c0_i32_0 : i32, i32
  }
  func.func @transform_2(%arg0: i32) -> (i32, i32) {
    %c0_i32 = arith.constant 0 : i32
    %c0_i32_0 = arith.constant 0 : i32
    %c0_i32_1 = arith.constant 0 : i32
    return %c0_i32, %c0_i32_0 : i32, i32
  }
  func.func @transform_3(%arg0: i32) -> (i32, i32) {
    %c0_i32 = arith.constant 0 : i32
    %c0_i32_0 = arith.constant 0 : i32
    return %arg0, %c0_i32 : i32, i32
  }
}

module attributes {stable_mosaic.version = 11 : i64} {
  func.func @_roi_head_kernel(%arg0: i32, %arg1: memref<448x32xf32, #tpu.memory_space<vmem>>, %arg2: memref<32x64xbf16, #tpu.memory_space<vmem>>, %arg3: memref<1x64xf32, #tpu.memory_space<vmem>>, %arg4: memref<64x128xbf16, #tpu.memory_space<vmem>>, %arg5: memref<1x128xf32, #tpu.memory_space<vmem>>, %arg6: memref<8x128xf32, #tpu.memory_space<vmem>>) attributes {dimension_semantics = [#tpu.dimension_semantics<parallel>], iteration_bounds = array<i64: 2>, scalar_prefetch = 0 : i64, scratch_operands = 0 : i64, tpu.core_type = #tpu.core_type<tc>, window_params = [{transform_indices = @transform_0, window_bounds = array<i64: 448, 32>}, {pipeline_mode = #tpu.pipeline_mode<synchronous>, transform_indices = @transform_1, window_bounds = array<i64: 32, 64>}, {pipeline_mode = #tpu.pipeline_mode<synchronous>, transform_indices = @transform_2, window_bounds = array<i64: 1, 64>}, {pipeline_mode = #tpu.pipeline_mode<synchronous>, transform_indices = @transform_3, window_bounds = array<i64: 64, 128>}, {pipeline_mode = #tpu.pipeline_mode<synchronous>, transform_indices = @transform_4, window_bounds = array<i64: 1, 128>}, {transform_indices = @transform_5, window_bounds = array<i64: 8, 128>}]} {
    %c0 = arith.constant 0 : index
    %c0_0 = arith.constant 0 : index
    %0 = vector.load %arg1[%c0, %c0_0] : memref<448x32xf32, #tpu.memory_space<vmem>>, vector<448x32xf32>
    %1 = arith.truncf %0 : vector<448x32xf32> to vector<448x32xbf16>
    %c0_1 = arith.constant 0 : index
    %c0_2 = arith.constant 0 : index
    %2 = vector.load %arg2[%c0_1, %c0_2] : memref<32x64xbf16, #tpu.memory_space<vmem>>, vector<32x64xbf16>
    %cst = arith.constant dense<0.000000e+00> : vector<448x64xf32>
    %3 = tpu.matmul %1, %2, %cst {dimension_numbers = #tpu.dot_dimension_numbers<[1], [0], [0], [1], [0, 0, 1, 1], [], []>} : vector<448x32xbf16>, vector<32x64xbf16>, vector<448x64xf32> -> vector<448x64xf32>
    %c0_3 = arith.constant 0 : index
    %c0_4 = arith.constant 0 : index
    %4 = vector.load %arg3[%c0_3, %c0_4] : memref<1x64xf32, #tpu.memory_space<vmem>>, vector<1x64xf32>
    %5 = vector.broadcast %4 : vector<1x64xf32> to vector<448x64xf32>
    %6 = arith.addf %3, %5 : vector<448x64xf32>
    %cst_5 = arith.constant 0.000000e+00 : f32
    %7 = vector.broadcast %cst_5 : f32 to vector<448x64xf32>
    %8 = arith.maximumf %6, %7 : vector<448x64xf32>
    %9 = tpu.iota {dimensions = array<i32: 0>} : vector<8x448xi32>
    %10 = tpu.iota {dimensions = array<i32: 1>} : vector<8x448xi32>
    %c56_i32 = arith.constant 56 : i32
    %11 = vector.broadcast %c56_i32 : i32 to vector<8x448xi32>
    %12 = arith.muli %9, %11 : vector<8x448xi32>
    %13 = arith.subi %10, %12 : vector<8x448xi32>
    %c0_i32 = arith.constant 0 : i32
    %14 = vector.broadcast %c0_i32 : i32 to vector<8x448xi32>
    %15 = arith.cmpi sge, %13, %14 : vector<8x448xi32>
    %c49_i32 = arith.constant 49 : i32
    %16 = vector.broadcast %c49_i32 : i32 to vector<8x448xi32>
    %17 = arith.cmpi slt, %13, %16 : vector<8x448xi32>
    %18 = arith.andi %15, %17 : vector<8x448xi1>
    %cst_6 = arith.constant 0.0204081628 : f32
    %cst_7 = arith.constant 0.000000e+00 : f32
    %19 = vector.broadcast %cst_6 : f32 to vector<8x448xf32>
    %20 = vector.broadcast %cst_7 : f32 to vector<8x448xf32>
    %21 = arith.select %18, %19, %20 : vector<8x448xi1>, vector<8x448xf32>
    %cst_8 = arith.constant dense<0.000000e+00> : vector<8x64xf32>
    %22 = tpu.matmul %21, %8, %cst_8 {dimension_numbers = #tpu.dot_dimension_numbers<[1], [0], [0], [1], [0, 0, 1, 1], [], []>} : vector<8x448xf32>, vector<448x64xf32>, vector<8x64xf32> -> vector<8x64xf32>
    %23 = arith.truncf %22 : vector<8x64xf32> to vector<8x64xbf16>
    %c0_9 = arith.constant 0 : index
    %c0_10 = arith.constant 0 : index
    %24 = vector.load %arg4[%c0_9, %c0_10] : memref<64x128xbf16, #tpu.memory_space<vmem>>, vector<64x128xbf16>
    %cst_11 = arith.constant dense<0.000000e+00> : vector<8x128xf32>
    %25 = tpu.matmul %23, %24, %cst_11 {dimension_numbers = #tpu.dot_dimension_numbers<[1], [0], [0], [1], [0, 0, 1, 1], [], []>} : vector<8x64xbf16>, vector<64x128xbf16>, vector<8x128xf32> -> vector<8x128xf32>
    %c0_12 = arith.constant 0 : index
    %c0_13 = arith.constant 0 : index
    %26 = vector.load %arg5[%c0_12, %c0_13] : memref<1x128xf32, #tpu.memory_space<vmem>>, vector<1x128xf32>
    %27 = vector.broadcast %26 : vector<1x128xf32> to vector<8x128xf32>
    %28 = arith.addf %25, %27 : vector<8x128xf32>
    %c0_14 = arith.constant 0 : index
    %c0_15 = arith.constant 0 : index
    %29 = vector.load %arg6[%c0_14, %c0_15] : memref<8x128xf32, #tpu.memory_space<vmem>>, vector<8x128xf32>
    tpu.vector_store %arg6[%c0_14, %c0_15], %28 {strides = array<i32>} : memref<8x128xf32, #tpu.memory_space<vmem>>, vector<8x128xf32>,
    return
  }
  func.func @transform_0(%arg0: i32) -> (i32, i32) {
    %c0_i32 = arith.constant 0 : i32
    %c0_i32_0 = arith.constant 0 : i32
    return %arg0, %c0_i32 : i32, i32
  }
  func.func @transform_1(%arg0: i32) -> (i32, i32) {
    %c0_i32 = arith.constant 0 : i32
    %c0_i32_0 = arith.constant 0 : i32
    %c0_i32_1 = arith.constant 0 : i32
    return %c0_i32, %c0_i32_0 : i32, i32
  }
  func.func @transform_2(%arg0: i32) -> (i32, i32) {
    %c0_i32 = arith.constant 0 : i32
    %c0_i32_0 = arith.constant 0 : i32
    %c0_i32_1 = arith.constant 0 : i32
    return %c0_i32, %c0_i32_0 : i32, i32
  }
  func.func @transform_3(%arg0: i32) -> (i32, i32) {
    %c0_i32 = arith.constant 0 : i32
    %c0_i32_0 = arith.constant 0 : i32
    %c0_i32_1 = arith.constant 0 : i32
    return %c0_i32, %c0_i32_0 : i32, i32
  }
  func.func @transform_4(%arg0: i32) -> (i32, i32) {
    %c0_i32 = arith.constant 0 : i32
    %c0_i32_0 = arith.constant 0 : i32
    %c0_i32_1 = arith.constant 0 : i32
    return %c0_i32, %c0_i32_0 : i32, i32
  }
  func.func @transform_5(%arg0: i32) -> (i32, i32) {
    %c0_i32 = arith.constant 0 : i32
    %c0_i32_0 = arith.constant 0 : i32
    return %arg0, %c0_i32 : i32, i32
  }
}

</mosaic_0001>

<llo_original>
// kernel: forward.5
$region0: #{forward.5}
  #allocation0 [shape = 'u32[]', space=smem, size = 0x4, offset = 0x4, fixed_abs, tag = 'smem constant byte address 0x4 - core index']
  #allocation1 [shape = 'u32[72,128]{1,0:T(1,128)}', space=vmem, size = 0x9000, scoped, tag = 'internal scratch']
  %s0 = inlined_call_operand.vmem [shape: f32[512,27], index: 0, kind: input, shape index: {}]
  %s1 = inlined_call_operand.vmem [shape: bf16[27,16], index: 1, kind: input, shape index: {}]
  %s2 = inlined_call_operand.vmem [shape: f32[1,16], index: 2, kind: input, shape index: {}]
  %s3 = inlined_call_operand.vmem [shape: f32[512,16], index: 3, kind: output, shape index: {}]
  %s4 = sld [smem:[#allocation0]]
  $region45: #{forward.5} parent=0
    _
  %s6 = ssub.s32 1, %s4
  %s7 = scalar_select 0, %s6, %s4
  loop: start=0, step=1, limit=6
  $region2: #{forward.5} parent=0 // loop_pre_header
    _
  $region3: #{forward.5} parent=0 // loop_header
    %s9 = sphi 0, %s13
    %p10 = scmp.ge.s32.totalorder %s9, 6
    %s19 = sphi 0, %s21
    %s22 = sphi 0, %s19
    %s23 = sphi 0, %s22
    %s39 = sphi 0, %s23
    %s43 = sphi 0, %s43
    %s45 = sphi 0, %s43
    %s46 = sphi 0, %s45
    %s60 = sphi 0, %s46
    %s64 = sphi 0, %s64
    %s66 = sphi 0, %s64
    %s67 = sphi 0, %s66
    %s81 = sphi 0, %s67
    %s87 = sphi 0, %s89
    %s90 = sphi 0, %s87
    %s91 = sphi 0, %s90
    %s107 = sphi 0, %s91
  $region4: #{forward.5} parent=0 // loop_header_branch
    %12 = sbr.rel (%p10) target = $region8
  $region5: #{forward.5} parent=0 // loop_body
    %s14 = ssub.s32 %s9, 1
    %s15 = ssub.s32 %s9, 2
    %s16 = sadd.s32 %s9, 1
    %s17 = ssub.s32 %s9, %s16
    %p18 = scmp.eq.s32.totalorder %s17, 0
    %s20 = sadd.s32 %s19, 1
    %s21 = scalar_select %p18, %s19, %s20
    %p24 = pneg %p18
    %p25 = scmp.eq.s32.totalorder %s9, 3
    %p26 = por %p24, %p25
    %p27 = scmp.ne.s32.totalorder %s19, %s22
    %p28 = scmp.eq.s32.totalorder %s9, 0
    %p29 = por %p27, %p28
    %p30 = scmp.ne.s32.totalorder %s19, %s22
    %p31 = scmp.eq.s32.totalorder %s14, 3
    %p32 = por %p30, %p31
    %p33 = scmp.ne.s32.totalorder %s22, %s23
    %p34 = scmp.eq.s32.totalorder %s14, 0
    %p35 = por %p33, %p34
    %p36 = scmp.ne.s32.totalorder %s22, %s23
    %p37 = scmp.eq.s32.totalorder %s15, 3
    %p38 = por %p36, %p37
    %p40 = scmp.ne.s32.totalorder %s23, %s39
    %p41 = scmp.eq.s32.totalorder %s15, 0
    %p42 = por %p40, %p41
    %s44 = sadd.s32 %s43, 1
    %p47 = scmp.eq.s32.totalorder %s9, 3
    %p48 = scmp.ne.s32.totalorder %s43, %s45
    %p49 = scmp.eq.s32.totalorder %s9, 0
    %p50 = por %p48, %p49
    %p51 = scmp.ne.s32.totalorder %s43, %s45
    %p52 = scmp.eq.s32.totalorder %s14, 3
    %p53 = por %p51, %p52
    %p54 = scmp.ne.s32.totalorder %s45, %s46
    %p55 = scmp.eq.s32.totalorder %s14, 0
    %p56 = por %p54, %p55
    %p57 = scmp.ne.s32.totalorder %s45, %s46
    %p58 = scmp.eq.s32.totalorder %s15, 3
    %p59 = por %p57, %p58
    %p61 = scmp.ne.s32.totalorder %s46, %s60
    %p62 = scmp.eq.s32.totalorder %s15, 0
    %p63 = por %p61, %p62
    %s65 = sadd.s32 %s64, 1
    %p68 = scmp.eq.s32.totalorder %s9, 3
    %p69 = scmp.ne.s32.totalorder %s64, %s66
    %p70 = scmp.eq.s32.totalorder %s9, 0
    %p71 = por %p69, %p70
    %p72 = scmp.ne.s32.totalorder %s64, %s66
    %p73 = scmp.eq.s32.totalorder %s14, 3
    %p74 = por %p72, %p73
    %p75 = scmp.ne.s32.totalorder %s66, %s67
    %p76 = scmp.eq.s32.totalorder %s14, 0
    %p77 = por %p75, %p76
    %p78 = scmp.ne.s32.totalorder %s66, %s67
    %p79 = scmp.eq.s32.totalorder %s15, 3
    %p80 = por %p78, %p79
    %p82 = scmp.ne.s32.totalorder %s67, %s81
    %p83 = scmp.eq.s32.totalorder %s15, 0
    %p84 = por %p82, %p83
    %s85 = ssub.s32 %s9, %s16
    %p86 = scmp.eq.s32.totalorder %s85, 0
    %s88 = sadd.s32 %s87, 1
    %s89 = scalar_select %p86, %s87, %s88
    %p92 = pneg %p86
    %p93 = scmp.eq.s32.totalorder %s9, 3
    %p94 = por %p92, %p93
    %p95 = scmp.ne.s32.totalorder %s87, %s90
    %p96 = scmp.eq.s32.totalorder %s9, 0
    %p97 = por %p95, %p96
    %p98 = scmp.ne.s32.totalorder %s87, %s90
    %p99 = scmp.eq.s32.totalorder %s14, 3
    %p100 = por %p98, %p99
    %p101 = scmp.ne.s32.totalorder %s90, %s91
    %p102 = scmp.eq.s32.totalorder %s14, 0
    %p103 = por %p101, %p102
    %p104 = scmp.ne.s32.totalorder %s90, %s91
    %p105 = scmp.eq.s32.totalorder %s15, 3
    %p106 = por %p104, %p105
    %p108 = scmp.ne.s32.totalorder %s91, %s107
    %p109 = scmp.eq.s32.totalorder %s15, 0
    %p110 = por %p108, %p109
    %p111 = scmp.le.s32.totalorder 1, %s9
    %p112 = scmp.lt.s32.totalorder %s9, 5
    %p113 = pnand %p111, %p112
    %p114 = pneg %p113
    // Predicated region
    $region9: #{forward.5} parent=5 // pred_check
      _
    $region10: #{forward.5} parent=5 // pred_check_branch
      %116 = sbr.rel (%p113) target = $region12
    $region11: #{forward.5} parent=5 // pred_region
      %s117 = ssub.s32 %s9, 1
      // Predicated region
      $region13: #{forward.5} parent=11 // pred_check
        %p118 = pneg %p56
      $region14: #{forward.5} parent=11 // pred_check_branch
        %120 = sbr.rel (%p118) target = $region16
      $region15: #{forward.5} parent=11 // pred_region
        _
      $region16: #{forward.5} parent=11 // pred_fallthru
        _
      // Predicated region
      $region17: #{forward.5} parent=11 // pred_check
        %p121 = pneg %p77
      $region18: #{forward.5} parent=11 // pred_check_branch
        %123 = sbr.rel (%p121) target = $region20
      $region19: #{forward.5} parent=11 // pred_region
        _
      $region20: #{forward.5} parent=11 // pred_fallthru
        _
    $region12: #{forward.5} parent=5 // pred_fallthru
      _
    %p124 = scmp.lt.s32.totalorder %s9, 4
    // Predicated region
    $region21: #{forward.5} parent=5 // pred_check
      %p125 = pneg %p124
    $region22: #{forward.5} parent=5 // pred_check_branch
      %127 = sbr.rel (%p125) target = $region24
    $region23: #{forward.5} parent=5 // pred_region
      // Predicated region
      $region25: #{forward.5} parent=23 // pred_check
        %p128 = pneg %p29
      $region26: #{forward.5} parent=23 // pred_check_branch
        %130 = sbr.rel (%p128) target = $region28
      $region27: #{forward.5} parent=23 // pred_region
        %s131 = smul.u32 16, %s9
        %p132 = scmp.lt.s32.totalorder %s131, 63
        %s133 = scalar_select %p132, %s131, 63
        %s134 = smul.addr %s133, 8
        %s135 = scalar_lea.vmem %s0, %s134
        %s136 = smul.u32 16, %s9
      $region28: #{forward.5} parent=23 // pred_fallthru
        _
    $region24: #{forward.5} parent=5 // pred_fallthru
      _
    %p137 = scmp.le.s32.totalorder 1, %s9
    %p138 = scmp.lt.s32.totalorder %s9, 5
    %p139 = pnand %p137, %p138
    %p140 = pneg %p139
    // Predicated region
    $region29: #{forward.5} parent=5 // pred_check
      _
    $region30: #{forward.5} parent=5 // pred_check_branch
      %142 = sbr.rel (%p139) target = $region32
    $region31: #{forward.5} parent=5 // pred_region
      %s143 = ssub.s32 %s9, 1
      %s144 = smul.u32 16, %s14
      %p145 = scmp.lt.s32.totalorder %s144, 63
      %s146 = scalar_select %p145, %s144, 63
      %s147 = smul.addr %s146, 8
      %s148 = scalar_lea.vmem %s0, %s147
      %p149 = pneg %p35
      %p150 = pneg %p32
      %p151 = pneg %p56
      %p152 = pneg %p53
      %p153 = pneg %p77
      %p154 = pneg %p74
      %p155 = pneg %p103
      %p156 = pneg %p100
      %s157 = smul.u32 16, %s14
      %p158 = scmp.lt.s32.totalorder %s157, 63
      %s159 = scalar_select %p158, %s157, 63
      %s160 = smul.addr %s159, 8
      %s161 = scalar_lea.vmem %s3, %s160
      %s162 = smul.u32 16, %s14
      %p163 = scmp.lt.s32.totalorder %s162, 63
      %s164 = scalar_select %p163, %s162, 63
      %s165 = smul.addr %s164, 8
      %s166 = scalar_lea.vmem %s0, %s165
      %s167 = smul.u32 16, %s14
      %s168 = smul.u32 16, %s14
      %p169 = scmp.lt.s32.totalorder %s168, 63
      %s170 = scalar_select %p169, %s168, 63
      %s171 = smul.addr %s170, 8
      %s172 = scalar_lea.vmem %s3, %s171
      %s173 = smul.u32 16, %s14
      %v175 = vld [vmem:[%s166] sm:$0xff]
      %v176 = vld [vmem:[%s166 + $0x8] sm:$0xff]
      %v177 = vld [vmem:[%s166 + $0x10] sm:$0xff]
      %v178 = vld [vmem:[%s166 + $0x18] sm:$0xff]
      %v179 = vld [vmem:[%s166 + $0x20] sm:$0xff]
      %v180 = vld [vmem:[%s166 + $0x28] sm:$0xff]
      %v181 = vld [vmem:[%s166 + $0x30] sm:$0xff]
      %v182 = vld [vmem:[%s166 + $0x38] sm:$0xff]
      %v183 = vld [vmem:[%s166 + $0x40] sm:$0xff]
      %v184 = vld [vmem:[%s166 + $0x48] sm:$0xff]
      %v185 = vld [vmem:[%s166 + $0x50] sm:$0xff]
      %v186 = vld [vmem:[%s166 + $0x58] sm:$0xff]
      %v187 = vld [vmem:[%s166 + $0x60] sm:$0xff]
      %v188 = vld [vmem:[%s166 + $0x68] sm:$0xff]
      %v189 = vld [vmem:[%s166 + $0x70] sm:$0xff]
      %v190 = vld [vmem:[%s166 + $0x78] sm:$0xff]
      %v191 = vpack.c.bf16 %v176, %v175
      %v192 = vpack.c.bf16 %v178, %v177
      %v193 = vpack.c.bf16 %v180, %v179
      %v194 = vpack.c.bf16 %v182, %v181
      %v195 = vpack.c.bf16 %v184, %v183
      %v196 = vpack.c.bf16 %v186, %v185
      %v197 = vpack.c.bf16 %v188, %v187
      %v198 = vpack.c.bf16 %v190, %v189
      %v199 = vld [vmem:[%s1] sm:$0xf]
      %v200 = vld [vmem:[%s1 + $0x4] sm:$0xf]
      %v201 = vld [vmem:[%s1 + $0x8] sm:$0xf]
      %v202 = vld [vmem:[%s1 + $0xc] sm:$0x3]
      %v203 = vld [vmem:[%s2] sm:$0x1]
      %v205 = vperm.slane %v203, 0
      %v211 = vunpack.c.l.b16 %v199
      %v212 = vunpack.c.l.b16 %v200
      %v213 = vunpack.c.l.b16 %v201
      %v214 = vunpack.c.l.b16 %v202
      %v215 = vpack.c.b16 %v212, %v211
      %v216 = vpack.c.b16 %v214, %v213
      %vm218 = vcmask 220160
      %v220 = vsel %vm218, %v191, 0
      %v223 = vsel %vm218, %v192, 0
      %v226 = vsel %vm218, %v193, 0
      %v229 = vsel %vm218, %v194, 0
      %v232 = vsel %vm218, %v195, 0
      %v235 = vsel %vm218, %v196, 0
      %v238 = vsel %vm218, %v197, 0
      %v241 = vsel %vm218, %v198, 0
      %vm243 = vcmask 1044480
      %vm244 = vcmask 1045504
      %v245 = vsel %vm243, 4294967295, 65535
      %v246 = vsel %vm244, %v245, 0
      %v248 = vand.u32 %v216, %v246
      %250 = vmatpush.bf16.msra.mxu0 0
      %251 = vmatpush.bf16.msra.mxu0 0
      %252 = vmatpush.bf16.msra.mxu0 0
      %253 = vmatpush.bf16.msra.mxu0 0
      %254 = vmatpush.bf16.msra.mxu0 0
      %255 = vmatpush.bf16.msra.mxu0 0
      %256 = vmatpush.bf16.msra.mxu0 %v248
      %257 = vmatpush.bf16.msra.mxu0 %v215
      %258 = vmatmul.bf16.gmra.mxu0 %v220
      %v259 = vpop.f32.mrf.mxu0
      %v260 = vadd.f32 %v205, %v259
      %v261 = vpop.f32.mrf.mxu0
      %v262 = vadd.f32 %v205, %v261
      %263 = vmatmul.bf16.gmra.mxu0 %v223
      %v264 = vpop.f32.mrf.mxu0
      %v265 = vadd.f32 %v205, %v264
      %v266 = vpop.f32.mrf.mxu0
      %v267 = vadd.f32 %v205, %v266
      %268 = vmatmul.bf16.gmra.mxu0 %v226
      %v269 = vpop.f32.mrf.mxu0
      %v270 = vadd.f32 %v205, %v269
      %v271 = vpop.f32.mrf.mxu0
      %v272 = vadd.f32 %v205, %v271
      %273 = vmatmul.bf16.gmra.mxu0 %v229
      %v274 = vpop.f32.mrf.mxu0
      %v275 = vadd.f32 %v205, %v274
      %v276 = vpop.f32.mrf.mxu0
      %v277 = vadd.f32 %v205, %v276
      %278 = vmatmul.bf16.gmra.mxu0 %v232
      %v279 = vpop.f32.mrf.mxu0
      %v280 = vadd.f32 %v205, %v279
      %v281 = vpop.f32.mrf.mxu0
      %v282 = vadd.f32 %v205, %v281
      %283 = vmatmul.bf16.gmra.mxu0 %v235
      %v284 = vpop.f32.mrf.mxu0
      %v285 = vadd.f32 %v205, %v284
      %v286 = vpop.f32.mrf.mxu0
      %v287 = vadd.f32 %v205, %v286
      %288 = vmatmul.bf16.gmra.mxu0 %v238
      %v289 = vpop.f32.mrf.mxu0
      %v290 = vadd.f32 %v205, %v289
      %v291 = vpop.f32.mrf.mxu0
      %v292 = vadd.f32 %v205, %v291
      %293 = vmatmul.bf16.gmra.mxu0 %v241
      %v294 = vpop.f32.mrf.mxu0
      %v295 = vadd.f32 %v205, %v294
      %v296 = vpop.f32.mrf.mxu0
      %v297 = vadd.f32 %v205, %v296
      %298 = vdwg.mxu0
      %v299 = vmax.f32 %v260, 0.0
      %v300 = vmax.f32 %v262, 0.0
      %v301 = vmax.f32 %v265, 0.0
      %v302 = vmax.f32 %v267, 0.0
      %v303 = vmax.f32 %v270, 0.0
      %v304 = vmax.f32 %v272, 0.0
      %v305 = vmax.f32 %v275, 0.0
      %v306 = vmax.f32 %v277, 0.0
      %v307 = vmax.f32 %v280, 0.0
      %v308 = vmax.f32 %v282, 0.0
      %v309 = vmax.f32 %v285, 0.0
      %v310 = vmax.f32 %v287, 0.0
      %v311 = vmax.f32 %v290, 0.0
      %v312 = vmax.f32 %v292, 0.0
      %v313 = vmax.f32 %v295, 0.0
      %v314 = vmax.f32 %v297, 0.0
      %vm315 = vcmask 130048
      %316 = vst.msk [vmem:[%s172] sm:$0xff] %vm315, %v299
      %317 = vst.msk [vmem:[%s172 + $0x8] sm:$0xff] %vm315, %v300
      %318 = vst.msk [vmem:[%s172 + $0x10] sm:$0xff] %vm315, %v301
      %319 = vst.msk [vmem:[%s172 + $0x18] sm:$0xff] %vm315, %v302
      %320 = vst.msk [vmem:[%s172 + $0x20] sm:$0xff] %vm315, %v303
      %321 = vst.msk [vmem:[%s172 + $0x28] sm:$0xff] %vm315, %v304
      %322 = vst.msk [vmem:[%s172 + $0x30] sm:$0xff] %vm315, %v305
      %323 = vst.msk [vmem:[%s172 + $0x38] sm:$0xff] %vm315, %v306
      %324 = vst.msk [vmem:[%s172 + $0x40] sm:$0xff] %vm315, %v307
      %325 = vst.msk [vmem:[%s172 + $0x48] sm:$0xff] %vm315, %v308
      %326 = vst.msk [vmem:[%s172 + $0x50] sm:$0xff] %vm315, %v309
      %327 = vst.msk [vmem:[%s172 + $0x58] sm:$0xff] %vm315, %v310
      %328 = vst.msk [vmem:[%s172 + $0x60] sm:$0xff] %vm315, %v311
      %329 = vst.msk [vmem:[%s172 + $0x68] sm:$0xff] %vm315, %v312
      %330 = vst.msk [vmem:[%s172 + $0x70] sm:$0xff] %vm315, %v313
      %331 = vst.msk [vmem:[%s172 + $0x78] sm:$0xff] %vm315, %v314
      %s332 = smul.u32 16, %s14
      %p333 = scmp.lt.s32.totalorder %s332, 63
      %s334 = scalar_select %p333, %s332, 63
      %s335 = smul.addr %s334, 8
      %s336 = scalar_lea.vmem %s3, %s335
      // Predicated region
      $region33: #{forward.5} parent=31 // pred_check
        %p337 = pneg %p100
      $region34: #{forward.5} parent=31 // pred_check_branch
        %339 = sbr.rel (%p337) target = $region36
      $region35: #{forward.5} parent=31 // pred_region
        %s340 = smul.u32 16, %s14
      $region36: #{forward.5} parent=31 // pred_fallthru
        _
    $region32: #{forward.5} parent=5 // pred_fallthru
      _
    %p341 = scmp.le.s32.totalorder 2, %s9
    // Predicated region
    $region37: #{forward.5} parent=5 // pred_check
      %p342 = pneg %p341
    $region38: #{forward.5} parent=5 // pred_check_branch
      %344 = sbr.rel (%p342) target = $region40
    $region39: #{forward.5} parent=5 // pred_region
      %s345 = ssub.s32 %s9, 2
      // Predicated region
      $region41: #{forward.5} parent=39 // pred_check
        %p346 = pneg %p106
      $region42: #{forward.5} parent=39 // pred_check_branch
        %348 = sbr.rel (%p346) target = $region44
      $region43: #{forward.5} parent=39 // pred_region
        %s349 = smul.u32 16, %s15
        %p350 = scmp.lt.s32.totalorder %s349, 63
        %s351 = scalar_select %p350, %s349, 63
        %s352 = smul.addr %s351, 8
        %s353 = scalar_lea.vmem %s3, %s352
      $region44: #{forward.5} parent=39 // pred_fallthru
        _
    $region40: #{forward.5} parent=5 // pred_fallthru
      _
  $region6: #{forward.5} parent=0 // loop_footer
    %s13 = sadd.s32 1, %s9
  $region7: #{forward.5} parent=0 // loop_footer_branch
    %8 = sbr.rel target = $region3
  $region8: #{forward.5} parent=0 // loop_exit
    _

// kernel: forward.6
$region0: #{forward.6}
  #allocation0 [shape = 'u32[]', space=smem, size = 0x4, offset = 0x4, fixed_abs, tag = 'smem constant byte address 0x4 - core index']
  #allocation1 [shape = 'u32[72,128]{1,0:T(1,128)}', space=vmem, size = 0x9000, scoped, tag = 'internal scratch']
  %s0 = inlined_call_operand.vmem [shape: f32[128,144], index: 0, kind: input, shape index: {}]
  %s1 = inlined_call_operand.vmem [shape: bf16[144,32], index: 1, kind: input, shape index: {}]
  %s2 = inlined_call_operand.vmem [shape: f32[1,32], index: 2, kind: input, shape index: {}]
  %s3 = inlined_call_operand.vmem [shape: f32[128,32], index: 3, kind: output, shape index: {}]
  %s4 = sld [smem:[#allocation0]]
  $region22: #{forward.6} parent=0
    _
  %s6 = ssub.s32 1, %s4
  %s7 = scalar_select 0, %s6, %s4
  // Predicated region
  $region2: #{forward.6} parent=0 // pred_check
    _
  $region3: #{forward.6} parent=0 // pred_check_branch
    %9 = sbr.rel (0) target = $region5
  $region4: #{forward.6} parent=0 // pred_region
    _
  $region5: #{forward.6} parent=0 // pred_fallthru
    _
  // Predicated region
  $region6: #{forward.6} parent=0 // pred_check
    _
  $region7: #{forward.6} parent=0 // pred_check_branch
    %11 = sbr.rel (0) target = $region9
  $region8: #{forward.6} parent=0 // pred_region
    _
  $region9: #{forward.6} parent=0 // pred_fallthru
    _
  // Predicated region
  $region10: #{forward.6} parent=0 // pred_check
    _
  $region11: #{forward.6} parent=0 // pred_check_branch
    %13 = sbr.rel (0) target = $region13
  $region12: #{forward.6} parent=0 // pred_region
    _
  $region13: #{forward.6} parent=0 // pred_fallthru
    _
  %v15 = vld [vmem:[%s0] sm:$0xff]
  %v16 = vld [vmem:[%s0 + $0x8] sm:$0xff]
  %v17 = vld [vmem:[%s0 + $0x10] sm:$0xff]
  %v18 = vld [vmem:[%s0 + $0x18] sm:$0xff]
  %v19 = vld [vmem:[%s0 + $0x20] sm:$0xff]
  %v20 = vld [vmem:[%s0 + $0x28] sm:$0xff]
  %v21 = vld [vmem:[%s0 + $0x30] sm:$0xff]
  %v22 = vld [vmem:[%s0 + $0x38] sm:$0xff]
  %v23 = vld [vmem:[%s0 + $0x40] sm:$0xff]
  %v24 = vld [vmem:[%s0 + $0x48] sm:$0xff]
  %v25 = vld [vmem:[%s0 + $0x50] sm:$0xff]
  %v26 = vld [vmem:[%s0 + $0x58] sm:$0xff]
  %v27 = vld [vmem:[%s0 + $0x60] sm:$0xff]
  %v28 = vld [vmem:[%s0 + $0x68] sm:$0xff]
  %v29 = vld [vmem:[%s0 + $0x70] sm:$0xff]
  %v30 = vld [vmem:[%s0 + $0x78] sm:$0xff]
  %v31 = vld [vmem:[%s0 + $0x80] sm:$0xff]
  %v32 = vld [vmem:[%s0 + $0x88] sm:$0xff]
  %v33 = vld [vmem:[%s0 + $0x90] sm:$0xff]
  %v34 = vld [vmem:[%s0 + $0x98] sm:$0xff]
  %v35 = vld [vmem:[%s0 + $0xa0] sm:$0xff]
  %v36 = vld [vmem:[%s0 + $0xa8] sm:$0xff]
  %v37 = vld [vmem:[%s0 + $0xb0] sm:$0xff]
  %v38 = vld [vmem:[%s0 + $0xb8] sm:$0xff]
  %v39 = vld [vmem:[%s0 + $0xc0] sm:$0xff]
  %v40 = vld [vmem:[%s0 + $0xc8] sm:$0xff]
  %v41 = vld [vmem:[%s0 + $0xd0] sm:$0xff]
  %v42 = vld [vmem:[%s0 + $0xd8] sm:$0xff]
  %v43 = vld [vmem:[%s0 + $0xe0] sm:$0xff]
  %v44 = vld [vmem:[%s0 + $0xe8] sm:$0xff]
  %v45 = vld [vmem:[%s0 + $0xf0] sm:$0xff]
  %v46 = vld [vmem:[%s0 + $0xf8] sm:$0xff]
  %v47 = vpack.c.bf16 %v17, %v15
  %v48 = vpack.c.bf16 %v18, %v16
  %v49 = vpack.c.bf16 %v21, %v19
  %v50 = vpack.c.bf16 %v22, %v20
  %v51 = vpack.c.bf16 %v25, %v23
  %v52 = vpack.c.bf16 %v26, %v24
  %v53 = vpack.c.bf16 %v29, %v27
  %v54 = vpack.c.bf16 %v30, %v28
  %v55 = vpack.c.bf16 %v33, %v31
  %v56 = vpack.c.bf16 %v34, %v32
  %v57 = vpack.c.bf16 %v37, %v35
  %v58 = vpack.c.bf16 %v38, %v36
  %v59 = vpack.c.bf16 %v41, %v39
  %v60 = vpack.c.bf16 %v42, %v40
  %v61 = vpack.c.bf16 %v45, %v43
  %v62 = vpack.c.bf16 %v46, %v44
  %v63 = vld [vmem:[%s1] sm:$0xf]
  %v64 = vld [vmem:[%s1 + $0x4] sm:$0xf]
  %v65 = vld [vmem:[%s1 + $0x8] sm:$0xf]
  %v66 = vld [vmem:[%s1 + $0xc] sm:$0xf]
  %v67 = vld [vmem:[%s1 + $0x10] sm:$0xf]
  %v68 = vld [vmem:[%s1 + $0x14] sm:$0xf]
  %v69 = vld [vmem:[%s1 + $0x18] sm:$0xf]
  %v70 = vld [vmem:[%s1 + $0x1c] sm:$0xf]
  %v71 = vld [vmem:[%s1 + $0x20] sm:$0xf]
  %v72 = vld [vmem:[%s1 + $0x24] sm:$0xf]
  %v73 = vld [vmem:[%s1 + $0x28] sm:$0xf]
  %v74 = vld [vmem:[%s1 + $0x2c] sm:$0xf]
  %v75 = vld [vmem:[%s1 + $0x30] sm:$0xf]
  %v76 = vld [vmem:[%s1 + $0x34] sm:$0xf]
  %v77 = vld [vmem:[%s1 + $0x38] sm:$0xf]
  %v78 = vld [vmem:[%s1 + $0x3c] sm:$0xf]
  %v79 = vld [vmem:[%s1 + $0x40] sm:$0xf]
  %v80 = vld [vmem:[%s1 + $0x44] sm:$0xf]
  %v81 = vld [vmem:[%s2] sm:$0x1]
  %v83 = vperm.slane %v81, 0
  %v103 = vunpack.c.l.b16 %v63
  %v104 = vunpack.c.l.b16 %v64
  %v105 = vunpack.c.l.b16 %v65
  %v106 = vunpack.c.l.b16 %v66
  %v107 = vunpack.c.l.b16 %v67
  %v108 = vunpack.c.l.b16 %v68
  %v109 = vunpack.c.l.b16 %v69
  %v110 = vunpack.c.l.b16 %v70
  %v111 = vunpack.c.l.b16 %v71
  %v112 = vunpack.c.l.b16 %v72
  %v113 = vunpack.c.l.b16 %v73
  %v114 = vunpack.c.l.b16 %v74
  %v115 = vunpack.c.l.b16 %v75
  %v116 = vunpack.c.l.b16 %v76
  %v117 = vunpack.c.l.b16 %v77
  %v118 = vunpack.c.l.b16 %v78
  %v119 = vunpack.c.l.b16 %v79
  %v120 = vunpack.c.l.b16 %v80
  %v121 = vpack.c.b16 %v104, %v103
  %v122 = vpack.c.b16 %v106, %v105
  %v123 = vpack.c.b16 %v108, %v107
  %v124 = vpack.c.b16 %v110, %v109
  %v125 = vpack.c.b16 %v112, %v111
  %v126 = vpack.c.b16 %v114, %v113
  %v127 = vpack.c.b16 %v116, %v115
  %v128 = vpack.c.b16 %v118, %v117
  %v129 = vpack.c.b16 %v120, %v119
  %vm139 = vcmask 130048
  %v141 = vsel %vm139, %v48, 0
  %v144 = vsel %vm139, %v50, 0
  %v147 = vsel %vm139, %v52, 0
  %v150 = vsel %vm139, %v54, 0
  %v153 = vsel %vm139, %v56, 0
  %v156 = vsel %vm139, %v58, 0
  %v159 = vsel %vm139, %v60, 0
  %v162 = vsel %vm139, %v62, 0
  %164 = vmatpush.bf16.msra.mxu0 %v128
  %165 = vmatpush.bf16.msra.mxu0 %v127
  %166 = vmatpush.bf16.msra.mxu0 %v126
  %167 = vmatpush.bf16.msra.mxu0 %v125
  %168 = vmatpush.bf16.msra.mxu0 %v124
  %169 = vmatpush.bf16.msra.mxu0 %v123
  %170 = vmatpush.bf16.msra.mxu0 %v122
  %171 = vmatpush.bf16.msra.mxu0 %v121
  %172 = vmatmul.bf16.gmra.mxu0 %v47
  %v173 = vpop.f32.mrf.mxu0
  %v174 = vadd.f32 %v83, %v173
  %v175 = vpop.f32.mrf.mxu0
  %v176 = vadd.f32 %v83, %v175
  %177 = vmatmul.bf16.gmra.mxu0 %v49
  %v178 = vpop.f32.mrf.mxu0
  %v179 = vadd.f32 %v83, %v178
  %v180 = vpop.f32.mrf.mxu0
  %v181 = vadd.f32 %v83, %v180
  %182 = vmatmul.bf16.gmra.mxu0 %v51
  %v183 = vpop.f32.mrf.mxu0
  %v184 = vadd.f32 %v83, %v183
  %v185 = vpop.f32.mrf.mxu0
  %v186 = vadd.f32 %v83, %v185
  %187 = vmatmul.bf16.gmra.mxu0 %v53
  %v188 = vpop.f32.mrf.mxu0
  %v189 = vadd.f32 %v83, %v188
  %v190 = vpop.f32.mrf.mxu0
  %v191 = vadd.f32 %v83, %v190
  %192 = vmatmul.bf16.gmra.mxu0 %v55
  %v193 = vpop.f32.mrf.mxu0
  %v194 = vadd.f32 %v83, %v193
  %v195 = vpop.f32.mrf.mxu0
  %v196 = vadd.f32 %v83, %v195
  %197 = vmatmul.bf16.gmra.mxu0 %v57
  %v198 = vpop.f32.mrf.mxu0
  %v199 = vadd.f32 %v83, %v198
  %v200 = vpop.f32.mrf.mxu0
  %v201 = vadd.f32 %v83, %v200
  %202 = vmatmul.bf16.gmra.mxu0 %v59
  %v203 = vpop.f32.mrf.mxu0
  %v204 = vadd.f32 %v83, %v203
  %v205 = vpop.f32.mrf.mxu0
  %v206 = vadd.f32 %v83, %v205
  %207 = vmatmul.bf16.gmra.mxu0 %v61
  %v208 = vpop.f32.mrf.mxu0
  %v209 = vadd.f32 %v83, %v208
  %v210 = vpop.f32.mrf.mxu0
  %v211 = vadd.f32 %v83, %v210
  %212 = vdwg.mxu0
  %213 = vmatpush.bf16.msra.mxu0 0
  %214 = vmatpush.bf16.msra.mxu0 0
  %215 = vmatpush.bf16.msra.mxu0 0
  %216 = vmatpush.bf16.msra.mxu0 0
  %217 = vmatpush.bf16.msra.mxu0 0
  %218 = vmatpush.bf16.msra.mxu0 0
  %219 = vmatpush.bf16.msra.mxu0 0
  %220 = vmatpush.bf16.msra.mxu0 %v129
  %221 = vmatmul.bf16.gmra.mxu0 %v141
  %v222 = vpop.f32.mrf.mxu0
  %v223 = vadd.f32 %v174, %v222
  %v224 = vpop.f32.mrf.mxu0
  %v225 = vadd.f32 %v176, %v224
  %226 = vmatmul.bf16.gmra.mxu0 %v144
  %v227 = vpop.f32.mrf.mxu0
  %v228 = vadd.f32 %v179, %v227
  %v229 = vpop.f32.mrf.mxu0
  %v230 = vadd.f32 %v181, %v229
  %231 = vmatmul.bf16.gmra.mxu0 %v147
  %v232 = vpop.f32.mrf.mxu0
  %v233 = vadd.f32 %v184, %v232
  %v234 = vpop.f32.mrf.mxu0
  %v235 = vadd.f32 %v186, %v234
  %236 = vmatmul.bf16.gmra.mxu0 %v150
  %v237 = vpop.f32.mrf.mxu0
  %v238 = vadd.f32 %v189, %v237
  %v239 = vpop.f32.mrf.mxu0
  %v240 = vadd.f32 %v191, %v239
  %241 = vmatmul.bf16.gmra.mxu0 %v153
  %v242 = vpop.f32.mrf.mxu0
  %v243 = vadd.f32 %v194, %v242
  %v244 = vpop.f32.mrf.mxu0
  %v245 = vadd.f32 %v196, %v244
  %246 = vmatmul.bf16.gmra.mxu0 %v156
  %v247 = vpop.f32.mrf.mxu0
  %v248 = vadd.f32 %v199, %v247
  %v249 = vpop.f32.mrf.mxu0
  %v250 = vadd.f32 %v201, %v249
  %251 = vmatmul.bf16.gmra.mxu0 %v159
  %v252 = vpop.f32.mrf.mxu0
  %v253 = vadd.f32 %v204, %v252
  %v254 = vpop.f32.mrf.mxu0
  %v255 = vadd.f32 %v206, %v254
  %256 = vmatmul.bf16.gmra.mxu0 %v162
  %v257 = vpop.f32.mrf.mxu0
  %v258 = vadd.f32 %v209, %v257
  %v259 = vpop.f32.mrf.mxu0
  %v260 = vadd.f32 %v211, %v259
  %261 = vdwg.mxu0
  %v262 = vmax.f32 %v223, 0.0
  %v263 = vmax.f32 %v225, 0.0
  %v264 = vmax.f32 %v228, 0.0
  %v265 = vmax.f32 %v230, 0.0
  %v266 = vmax.f32 %v233, 0.0
  %v267 = vmax.f32 %v235, 0.0
  %v268 = vmax.f32 %v238, 0.0
  %v269 = vmax.f32 %v240, 0.0
  %v270 = vmax.f32 %v243, 0.0
  %v271 = vmax.f32 %v245, 0.0
  %v272 = vmax.f32 %v248, 0.0
  %v273 = vmax.f32 %v250, 0.0
  %v274 = vmax.f32 %v253, 0.0
  %v275 = vmax.f32 %v255, 0.0
  %v276 = vmax.f32 %v258, 0.0
  %v277 = vmax.f32 %v260, 0.0
  %vm278 = vcmask 261120
  %279 = vst.msk [vmem:[%s3] sm:$0xff] %vm278, %v262
  %280 = vst.msk [vmem:[%s3 + $0x8] sm:$0xff] %vm278, %v263
  %281 = vst.msk [vmem:[%s3 + $0x10] sm:$0xff] %vm278, %v264
  %282 = vst.msk [vmem:[%s3 + $0x18] sm:$0xff] %vm278, %v265
  %283 = vst.msk [vmem:[%s3 + $0x20] sm:$0xff] %vm278, %v266
  %284 = vst.msk [vmem:[%s3 + $0x28] sm:$0xff] %vm278, %v267
  %285 = vst.msk [vmem:[%s3 + $0x30] sm:$0xff] %vm278, %v268
  %286 = vst.msk [vmem:[%s3 + $0x38] sm:$0xff] %vm278, %v269
  %287 = vst.msk [vmem:[%s3 + $0x40] sm:$0xff] %vm278, %v270
  %288 = vst.msk [vmem:[%s3 + $0x48] sm:$0xff] %vm278, %v271
  %289 = vst.msk [vmem:[%s3 + $0x50] sm:$0xff] %vm278, %v272
  %290 = vst.msk [vmem:[%s3 + $0x58] sm:$0xff] %vm278, %v273
  %291 = vst.msk [vmem:[%s3 + $0x60] sm:$0xff] %vm278, %v274
  %292 = vst.msk [vmem:[%s3 + $0x68] sm:$0xff] %vm278, %v275
  %293 = vst.msk [vmem:[%s3 + $0x70] sm:$0xff] %vm278, %v276
  %294 = vst.msk [vmem:[%s3 + $0x78] sm:$0xff] %vm278, %v277
  // Predicated region
  $region14: #{forward.6} parent=0 // pred_check
    _
  $region15: #{forward.6} parent=0 // pred_check_branch
    %296 = sbr.rel (0) target = $region17
  $region16: #{forward.6} parent=0 // pred_region
    _
  $region17: #{forward.6} parent=0 // pred_fallthru
    _
  // Predicated region
  $region18: #{forward.6} parent=0 // pred_check
    _
  $region19: #{forward.6} parent=0 // pred_check_branch
    %298 = sbr.rel (0) target = $region21
  $region20: #{forward.6} parent=0 // pred_region
    _
  $region21: #{forward.6} parent=0 // pred_fallthru
    _

// kernel: forward.8
$region0: #{forward.8}
  #allocation0 [shape = 'u32[]', space=smem, size = 0x4, offset = 0x4, fixed_abs, tag = 'smem constant byte address 0x4 - core index']
  #allocation1 [shape = 'u32[72,128]{1,0:T(1,128)}', space=vmem, size = 0x9000, scoped, tag = 'internal scratch']
  %s0 = inlined_call_operand.vmem [shape: f32[128,32], index: 0, kind: input, shape index: {}]
  %s1 = inlined_call_operand.vmem [shape: bf16[32,128], index: 1, kind: input, shape index: {}]
  %s2 = inlined_call_operand.vmem [shape: f32[1,128], index: 2, kind: input, shape index: {}]
  %s3 = inlined_call_operand.vmem [shape: f32[128,128], index: 3, kind: output, shape index: {}]
  %s4 = sld [smem:[#allocation0]]
  $region22: #{forward.8} parent=0
    _
  %s6 = ssub.s32 1, %s4
  %s7 = scalar_select 0, %s6, %s4
  // Predicated region
  $region2: #{forward.8} parent=0 // pred_check
    _
  $region3: #{forward.8} parent=0 // pred_check_branch
    %9 = sbr.rel (0) target = $region5
  $region4: #{forward.8} parent=0 // pred_region
    _
  $region5: #{forward.8} parent=0 // pred_fallthru
    _
  // Predicated region
  $region6: #{forward.8} parent=0 // pred_check
    _
  $region7: #{forward.8} parent=0 // pred_check_branch
    %11 = sbr.rel (0) target = $region9
  $region8: #{forward.8} parent=0 // pred_region
    _
  $region9: #{forward.8} parent=0 // pred_fallthru
    _
  // Predicated region
  $region10: #{forward.8} parent=0 // pred_check
    _
  $region11: #{forward.8} parent=0 // pred_check_branch
    %13 = sbr.rel (0) target = $region13
  $region12: #{forward.8} parent=0 // pred_region
    _
  $region13: #{forward.8} parent=0 // pred_fallthru
    _
  %v15 = vld [vmem:[%s0] sm:$0xff]
  %v16 = vld [vmem:[%s0 + $0x8] sm:$0xff]
  %v17 = vld [vmem:[%s0 + $0x10] sm:$0xff]
  %v18 = vld [vmem:[%s0 + $0x18] sm:$0xff]
  %v19 = vld [vmem:[%s0 + $0x20] sm:$0xff]
  %v20 = vld [vmem:[%s0 + $0x28] sm:$0xff]
  %v21 = vld [vmem:[%s0 + $0x30] sm:$0xff]
  %v22 = vld [vmem:[%s0 + $0x38] sm:$0xff]
  %v23 = vld [vmem:[%s0 + $0x40] sm:$0xff]
  %v24 = vld [vmem:[%s0 + $0x48] sm:$0xff]
  %v25 = vld [vmem:[%s0 + $0x50] sm:$0xff]
  %v26 = vld [vmem:[%s0 + $0x58] sm:$0xff]
  %v27 = vld [vmem:[%s0 + $0x60] sm:$0xff]
  %v28 = vld [vmem:[%s0 + $0x68] sm:$0xff]
  %v29 = vld [vmem:[%s0 + $0x70] sm:$0xff]
  %v30 = vld [vmem:[%s0 + $0x78] sm:$0xff]
  %v31 = vpack.c.bf16 %v16, %v15
  %v32 = vpack.c.bf16 %v18, %v17
  %v33 = vpack.c.bf16 %v20, %v19
  %v34 = vpack.c.bf16 %v22, %v21
  %v35 = vpack.c.bf16 %v24, %v23
  %v36 = vpack.c.bf16 %v26, %v25
  %v37 = vpack.c.bf16 %v28, %v27
  %v38 = vpack.c.bf16 %v30, %v29
  %v39 = vld [vmem:[%s1] sm:$0xf]
  %v40 = vld [vmem:[%s1 + $0x4] sm:$0xf]
  %v41 = vld [vmem:[%s1 + $0x8] sm:$0xf]
  %v42 = vld [vmem:[%s1 + $0xc] sm:$0xf]
  %v43 = vld [vmem:[%s2] sm:$0x1]
  %v45 = vperm.slane %v43, 0
  %v51 = vunpack.c.l.b16 %v39
  %v52 = vunpack.c.l.b16 %v40
  %v53 = vunpack.c.l.b16 %v41
  %v54 = vunpack.c.l.b16 %v42
  %v55 = vpack.c.b16 %v52, %v51
  %v56 = vpack.c.b16 %v54, %v53
  %vm59 = vcmask 261120
  %v61 = vsel %vm59, %v31, 0
  %v64 = vsel %vm59, %v32, 0
  %v67 = vsel %vm59, %v33, 0
  %v70 = vsel %vm59, %v34, 0
  %v73 = vsel %vm59, %v35, 0
  %v76 = vsel %vm59, %v36, 0
  %v79 = vsel %vm59, %v37, 0
  %v82 = vsel %vm59, %v38, 0
  %84 = vmatpush.bf16.msra.mxu0 0
  %85 = vmatpush.bf16.msra.mxu0 0
  %86 = vmatpush.bf16.msra.mxu0 0
  %87 = vmatpush.bf16.msra.mxu0 0
  %88 = vmatpush.bf16.msra.mxu0 0
  %89 = vmatpush.bf16.msra.mxu0 0
  %90 = vmatpush.bf16.msra.mxu0 %v56
  %91 = vmatpush.bf16.msra.mxu0 %v55
  %92 = vmatmul.bf16.gmra.mxu0 %v61
  %v93 = vpop.f32.mrf.mxu0
  %v94 = vadd.f32 %v45, %v93
  %v95 = vpop.f32.mrf.mxu0
  %v96 = vadd.f32 %v45, %v95
  %97 = vmatmul.bf16.gmra.mxu0 %v64
  %v98 = vpop.f32.mrf.mxu0
  %v99 = vadd.f32 %v45, %v98
  %v100 = vpop.f32.mrf.mxu0
  %v101 = vadd.f32 %v45, %v100
  %102 = vmatmul.bf16.gmra.mxu0 %v67
  %v103 = vpop.f32.mrf.mxu0
  %v104 = vadd.f32 %v45, %v103
  %v105 = vpop.f32.mrf.mxu0
  %v106 = vadd.f32 %v45, %v105
  %107 = vmatmul.bf16.gmra.mxu0 %v70
  %v108 = vpop.f32.mrf.mxu0
  %v109 = vadd.f32 %v45, %v108
  %v110 = vpop.f32.mrf.mxu0
  %v111 = vadd.f32 %v45, %v110
  %112 = vmatmul.bf16.gmra.mxu0 %v73
  %v113 = vpop.f32.mrf.mxu0
  %v114 = vadd.f32 %v45, %v113
  %v115 = vpop.f32.mrf.mxu0
  %v116 = vadd.f32 %v45, %v115
  %117 = vmatmul.bf16.gmra.mxu0 %v76
  %v118 = vpop.f32.mrf.mxu0
  %v119 = vadd.f32 %v45, %v118
  %v120 = vpop.f32.mrf.mxu0
  %v121 = vadd.f32 %v45, %v120
  %122 = vmatmul.bf16.gmra.mxu0 %v79
  %v123 = vpop.f32.mrf.mxu0
  %v124 = vadd.f32 %v45, %v123
  %v125 = vpop.f32.mrf.mxu0
  %v126 = vadd.f32 %v45, %v125
  %127 = vmatmul.bf16.gmra.mxu0 %v82
  %v128 = vpop.f32.mrf.mxu0
  %v129 = vadd.f32 %v45, %v128
  %v130 = vpop.f32.mrf.mxu0
  %v131 = vadd.f32 %v45, %v130
  %132 = vdwg.mxu0
  %133 = vst [vmem:[%s3] sm:$0xff] %v94
  %134 = vst [vmem:[%s3 + $0x8] sm:$0xff] %v96
  %135 = vst [vmem:[%s3 + $0x10] sm:$0xff] %v99
  %136 = vst [vmem:[%s3 + $0x18] sm:$0xff] %v101
  %137 = vst [vmem:[%s3 + $0x20] sm:$0xff] %v104
  %138 = vst [vmem:[%s3 + $0x28] sm:$0xff] %v106
  %139 = vst [vmem:[%s3 + $0x30] sm:$0xff] %v109
  %140 = vst [vmem:[%s3 + $0x38] sm:$0xff] %v111
  %141 = vst [vmem:[%s3 + $0x40] sm:$0xff] %v114
  %142 = vst [vmem:[%s3 + $0x48] sm:$0xff] %v116
  %143 = vst [vmem:[%s3 + $0x50] sm:$0xff] %v119
  %144 = vst [vmem:[%s3 + $0x58] sm:$0xff] %v121
  %145 = vst [vmem:[%s3 + $0x60] sm:$0xff] %v124
  %146 = vst [vmem:[%s3 + $0x68] sm:$0xff] %v126
  %147 = vst [vmem:[%s3 + $0x70] sm:$0xff] %v129
  %148 = vst [vmem:[%s3 + $0x78] sm:$0xff] %v131
  // Predicated region
  $region14: #{forward.8} parent=0 // pred_check
    _
  $region15: #{forward.8} parent=0 // pred_check_branch
    %150 = sbr.rel (0) target = $region17
  $region16: #{forward.8} parent=0 // pred_region
    _
  $region17: #{forward.8} parent=0 // pred_fallthru
    _
  // Predicated region
  $region18: #{forward.8} parent=0 // pred_check
    _
  $region19: #{forward.8} parent=0 // pred_check_branch
    %152 = sbr.rel (0) target = $region21
  $region20: #{forward.8} parent=0 // pred_region
    _
  $region21: #{forward.8} parent=0 // pred_fallthru
    _

// kernel: forward.7
$region0: #{forward.7}
  #allocation0 [shape = 'u32[]', space=smem, size = 0x4, offset = 0x4, fixed_abs, tag = 'smem constant byte address 0x4 - core index']
  #allocation1 [shape = 'u32[72,128]{1,0:T(1,128)}', space=vmem, size = 0x9000, scoped, tag = 'internal scratch']
  %s0 = inlined_call_operand.vmem [shape: f32[128,288], index: 0, kind: input, shape index: {}]
  %s1 = inlined_call_operand.vmem [shape: bf16[288,32], index: 1, kind: input, shape index: {}]
  %s2 = inlined_call_operand.vmem [shape: f32[1,32], index: 2, kind: input, shape index: {}]
  %s3 = inlined_call_operand.vmem [shape: f32[128,32], index: 3, kind: output, shape index: {}]
  %s4 = sld [smem:[#allocation0]]
  $region22: #{forward.7} parent=0
    _
  %s6 = ssub.s32 1, %s4
  %s7 = scalar_select 0, %s6, %s4
  // Predicated region
  $region2: #{forward.7} parent=0 // pred_check
    _
  $region3: #{forward.7} parent=0 // pred_check_branch
    %9 = sbr.rel (0) target = $region5
  $region4: #{forward.7} parent=0 // pred_region
    _
  $region5: #{forward.7} parent=0 // pred_fallthru
    _
  // Predicated region
  $region6: #{forward.7} parent=0 // pred_check
    _
  $region7: #{forward.7} parent=0 // pred_check_branch
    %11 = sbr.rel (0) target = $region9
  $region8: #{forward.7} parent=0 // pred_region
    _
  $region9: #{forward.7} parent=0 // pred_fallthru
    _
  // Predicated region
  $region10: #{forward.7} parent=0 // pred_check
    _
  $region11: #{forward.7} parent=0 // pred_check_branch
    %13 = sbr.rel (0) target = $region13
  $region12: #{forward.7} parent=0 // pred_region
    _
  $region13: #{forward.7} parent=0 // pred_fallthru
    _
  %v15 = vld [vmem:[%s0] sm:$0xff]
  %v16 = vld [vmem:[%s0 + $0x8] sm:$0xff]
  %v17 = vld [vmem:[%s0 + $0x10] sm:$0xff]
  %v18 = vld [vmem:[%s0 + $0x18] sm:$0xff]
  %v19 = vld [vmem:[%s0 + $0x20] sm:$0xff]
  %v20 = vld [vmem:[%s0 + $0x28] sm:$0xff]
  %v21 = vld [vmem:[%s0 + $0x30] sm:$0xff]
  %v22 = vld [vmem:[%s0 + $0x38] sm:$0xff]
  %v23 = vld [vmem:[%s0 + $0x40] sm:$0xff]
  %v24 = vld [vmem:[%s0 + $0x48] sm:$0xff]
  %v25 = vld [vmem:[%s0 + $0x50] sm:$0xff]
  %v26 = vld [vmem:[%s0 + $0x58] sm:$0xff]
  %v27 = vld [vmem:[%s0 + $0x60] sm:$0xff]
  %v28 = vld [vmem:[%s0 + $0x68] sm:$0xff]
  %v29 = vld [vmem:[%s0 + $0x70] sm:$0xff]
  %v30 = vld [vmem:[%s0 + $0x78] sm:$0xff]
  %v31 = vld [vmem:[%s0 + $0x80] sm:$0xff]
  %v32 = vld [vmem:[%s0 + $0x88] sm:$0xff]
  %v33 = vld [vmem:[%s0 + $0x90] sm:$0xff]
  %v34 = vld [vmem:[%s0 + $0x98] sm:$0xff]
  %v35 = vld [vmem:[%s0 + $0xa0] sm:$0xff]
  %v36 = vld [vmem:[%s0 + $0xa8] sm:$0xff]
  %v37 = vld [vmem:[%s0 + $0xb0] sm:$0xff]
  %v38 = vld [vmem:[%s0 + $0xb8] sm:$0xff]
  %v39 = vld [vmem:[%s0 + $0xc0] sm:$0xff]
  %v40 = vld [vmem:[%s0 + $0xc8] sm:$0xff]
  %v41 = vld [vmem:[%s0 + $0xd0] sm:$0xff]
  %v42 = vld [vmem:[%s0 + $0xd8] sm:$0xff]
  %v43 = vld [vmem:[%s0 + $0xe0] sm:$0xff]
  %v44 = vld [vmem:[%s0 + $0xe8] sm:$0xff]
  %v45 = vld [vmem:[%s0 + $0xf0] sm:$0xff]
  %v46 = vld [vmem:[%s0 + $0xf8] sm:$0xff]
  %v47 = vld [vmem:[%s0 + $0x100] sm:$0xff]
  %v48 = vld [vmem:[%s0 + $0x108] sm:$0xff]
  %v49 = vld [vmem:[%s0 + $0x110] sm:$0xff]
  %v50 = vld [vmem:[%s0 + $0x118] sm:$0xff]
  %v51 = vld [vmem:[%s0 + $0x120] sm:$0xff]
  %v52 = vld [vmem:[%s0 + $0x128] sm:$0xff]
  %v53 = vld [vmem:[%s0 + $0x130] sm:$0xff]
  %v54 = vld [vmem:[%s0 + $0x138] sm:$0xff]
  %v55 = vld [vmem:[%s0 + $0x140] sm:$0xff]
  %v56 = vld [vmem:[%s0 + $0x148] sm:$0xff]
  %v57 = vld [vmem:[%s0 + $0x150] sm:$0xff]
  %v58 = vld [vmem:[%s0 + $0x158] sm:$0xff]
  %v59 = vld [vmem:[%s0 + $0x160] sm:$0xff]
  %v60 = vld [vmem:[%s0 + $0x168] sm:$0xff]
  %v61 = vld [vmem:[%s0 + $0x170] sm:$0xff]
  %v62 = vld [vmem:[%s0 + $0x178] sm:$0xff]
  %v63 = vpack.c.bf16 %v18, %v15
  %v64 = vpack.c.bf16 %v19, %v16
  %v65 = vpack.c.bf16 %v20, %v17
  %v66 = vpack.c.bf16 %v24, %v21
  %v67 = vpack.c.bf16 %v25, %v22
  %v68 = vpack.c.bf16 %v26, %v23
  %v69 = vpack.c.bf16 %v30, %v27
  %v70 = vpack.c.bf16 %v31, %v28
  %v71 = vpack.c.bf16 %v32, %v29
  %v72 = vpack.c.bf16 %v36, %v33
  %v73 = vpack.c.bf16 %v37, %v34
  %v74 = vpack.c.bf16 %v38, %v35
  %v75 = vpack.c.bf16 %v42, %v39
  %v76 = vpack.c.bf16 %v43, %v40
  %v77 = vpack.c.bf16 %v44, %v41
  %v78 = vpack.c.bf16 %v48, %v45
  %v79 = vpack.c.bf16 %v49, %v46
  %v80 = vpack.c.bf16 %v50, %v47
  %v81 = vpack.c.bf16 %v54, %v51
  %v82 = vpack.c.bf16 %v55, %v52
  %v83 = vpack.c.bf16 %v56, %v53
  %v84 = vpack.c.bf16 %v60, %v57
  %v85 = vpack.c.bf16 %v61, %v58
  %v86 = vpack.c.bf16 %v62, %v59
  %v87 = vld [vmem:[%s1] sm:$0xf]
  %v88 = vld [vmem:[%s1 + $0x4] sm:$0xf]
  %v89 = vld [vmem:[%s1 + $0x8] sm:$0xf]
  %v90 = vld [vmem:[%s1 + $0xc] sm:$0xf]
  %v91 = vld [vmem:[%s1 + $0x10] sm:$0xf]
  %v92 = vld [vmem:[%s1 + $0x14] sm:$0xf]
  %v93 = vld [vmem:[%s1 + $0x18] sm:$0xf]
  %v94 = vld [vmem:[%s1 + $0x1c] sm:$0xf]
  %v95 = vld [vmem:[%s1 + $0x20] sm:$0xf]
  %v96 = vld [vmem:[%s1 + $0x24] sm:$0xf]
  %v97 = vld [vmem:[%s1 + $0x28] sm:$0xf]
  %v98 = vld [vmem:[%s1 + $0x2c] sm:$0xf]
  %v99 = vld [vmem:[%s1 + $0x30] sm:$0xf]
  %v100 = vld [vmem:[%s1 + $0x34] sm:$0xf]
  %v101 = vld [vmem:[%s1 + $0x38] sm:$0xf]
  %v102 = vld [vmem:[%s1 + $0x3c] sm:$0xf]
  %v103 = vld [vmem:[%s1 + $0x40] sm:$0xf]
  %v104 = vld [vmem:[%s1 + $0x44] sm:$0xf]
  %v105 = vld [vmem:[%s1 + $0x48] sm:$0xf]
  %v106 = vld [vmem:[%s1 + $0x4c] sm:$0xf]
  %v107 = vld [vmem:[%s1 + $0x50] sm:$0xf]
  %v108 = vld [vmem:[%s1 + $0x54] sm:$0xf]
  %v109 = vld [vmem:[%s1 + $0x58] sm:$0xf]
  %v110 = vld [vmem:[%s1 + $0x5c] sm:$0xf]
  %v111 = vld [vmem:[%s1 + $0x60] sm:$0xf]
  %v112 = vld [vmem:[%s1 + $0x64] sm:$0xf]
  %v113 = vld [vmem:[%s1 + $0x68] sm:$0xf]
  %v114 = vld [vmem:[%s1 + $0x6c] sm:$0xf]
  %v115 = vld [vmem:[%s1 + $0x70] sm:$0xf]
  %v116 = vld [vmem:[%s1 + $0x74] sm:$0xf]
  %v117 = vld [vmem:[%s1 + $0x78] sm:$0xf]
  %v118 = vld [vmem:[%s1 + $0x7c] sm:$0xf]
  %v119 = vld [vmem:[%s1 + $0x80] sm:$0xf]
  %v120 = vld [vmem:[%s1 + $0x84] sm:$0xf]
  %v121 = vld [vmem:[%s1 + $0x88] sm:$0xf]
  %v122 = vld [vmem:[%s1 + $0x8c] sm:$0xf]
  %v123 = vld [vmem:[%s2] sm:$0x1]
  %v125 = vperm.slane %v123, 0
  %v163 = vunpack.c.l.b16 %v87
  %v164 = vunpack.c.l.b16 %v88
  %v165 = vunpack.c.l.b16 %v89
  %v166 = vunpack.c.l.b16 %v90
  %v167 = vunpack.c.l.b16 %v91
  %v168 = vunpack.c.l.b16 %v92
  %v169 = vunpack.c.l.b16 %v93
  %v170 = vunpack.c.l.b16 %v94
  %v171 = vunpack.c.l.b16 %v95
  %v172 = vunpack.c.l.b16 %v96
  %v173 = vunpack.c.l.b16 %v97
  %v174 = vunpack.c.l.b16 %v98
  %v175 = vunpack.c.l.b16 %v99
  %v176 = vunpack.c.l.b16 %v100
  %v177 = vunpack.c.l.b16 %v101
  %v178 = vunpack.c.l.b16 %v102
  %v179 = vunpack.c.l.b16 %v103
  %v180 = vunpack.c.l.b16 %v104
  %v181 = vunpack.c.l.b16 %v105
  %v182 = vunpack.c.l.b16 %v106
  %v183 = vunpack.c.l.b16 %v107
  %v184 = vunpack.c.l.b16 %v108
  %v185 = vunpack.c.l.b16 %v109
  %v186 = vunpack.c.l.b16 %v110
  %v187 = vunpack.c.l.b16 %v111
  %v188 = vunpack.c.l.b16 %v112
  %v189 = vunpack.c.l.b16 %v113
  %v190 = vunpack.c.l.b16 %v114
  %v191 = vunpack.c.l.b16 %v115
  %v192 = vunpack.c.l.b16 %v116
  %v193 = vunpack.c.l.b16 %v117
  %v194 = vunpack.c.l.b16 %v118
  %v195 = vunpack.c.l.b16 %v119
  %v196 = vunpack.c.l.b16 %v120
  %v197 = vunpack.c.l.b16 %v121
  %v198 = vunpack.c.l.b16 %v122
  %v199 = vpack.c.b16 %v164, %v163
  %v200 = vpack.c.b16 %v166, %v165
  %v201 = vpack.c.b16 %v168, %v167
  %v202 = vpack.c.b16 %v170, %v169
  %v203 = vpack.c.b16 %v172, %v171
  %v204 = vpack.c.b16 %v174, %v173
  %v205 = vpack.c.b16 %v176, %v175
  %v206 = vpack.c.b16 %v178, %v177
  %v207 = vpack.c.b16 %v180, %v179
  %v208 = vpack.c.b16 %v182, %v181
  %v209 = vpack.c.b16 %v184, %v183
  %v210 = vpack.c.b16 %v186, %v185
  %v211 = vpack.c.b16 %v188, %v187
  %v212 = vpack.c.b16 %v190, %v189
  %v213 = vpack.c.b16 %v192, %v191
  %v214 = vpack.c.b16 %v194, %v193
  %v215 = vpack.c.b16 %v196, %v195
  %v216 = vpack.c.b16 %v198, %v197
  %vm235 = vcmask 261120
  %v237 = vsel %vm235, %v65, 0
  %v240 = vsel %vm235, %v68, 0
  %v243 = vsel %vm235, %v71, 0
  %v246 = vsel %vm235, %v74, 0
  %v249 = vsel %vm235, %v77, 0
  %v252 = vsel %vm235, %v80, 0
  %v255 = vsel %vm235, %v83, 0
  %v258 = vsel %vm235, %v86, 0
  %260 = vmatpush.bf16.msra.mxu0 %v206
  %261 = vmatpush.bf16.msra.mxu0 %v205
  %262 = vmatpush.bf16.msra.mxu0 %v204
  %263 = vmatpush.bf16.msra.mxu0 %v203
  %264 = vmatpush.bf16.msra.mxu0 %v202
  %265 = vmatpush.bf16.msra.mxu0 %v201
  %266 = vmatpush.bf16.msra.mxu0 %v200
  %267 = vmatpush.bf16.msra.mxu0 %v199
  %268 = vmatmul.bf16.gmra.mxu0 %v63
  %v269 = vpop.f32.mrf.mxu0
  %v270 = vadd.f32 %v125, %v269
  %v271 = vpop.f32.mrf.mxu0
  %v272 = vadd.f32 %v125, %v271
  %273 = vmatmul.bf16.gmra.mxu0 %v66
  %v274 = vpop.f32.mrf.mxu0
  %v275 = vadd.f32 %v125, %v274
  %v276 = vpop.f32.mrf.mxu0
  %v277 = vadd.f32 %v125, %v276
  %278 = vmatmul.bf16.gmra.mxu0 %v69
  %v279 = vpop.f32.mrf.mxu0
  %v280 = vadd.f32 %v125, %v279
  %v281 = vpop.f32.mrf.mxu0
  %v282 = vadd.f32 %v125, %v281
  %283 = vmatmul.bf16.gmra.mxu0 %v72
  %v284 = vpop.f32.mrf.mxu0
  %v285 = vadd.f32 %v125, %v284
  %v286 = vpop.f32.mrf.mxu0
  %v287 = vadd.f32 %v125, %v286
  %288 = vmatmul.bf16.gmra.mxu0 %v75
  %v289 = vpop.f32.mrf.mxu0
  %v290 = vadd.f32 %v125, %v289
  %v291 = vpop.f32.mrf.mxu0
  %v292 = vadd.f32 %v125, %v291
  %293 = vmatmul.bf16.gmra.mxu0 %v78
  %v294 = vpop.f32.mrf.mxu0
  %v295 = vadd.f32 %v125, %v294
  %v296 = vpop.f32.mrf.mxu0
  %v297 = vadd.f32 %v125, %v296
  %298 = vmatmul.bf16.gmra.mxu0 %v81
  %v299 = vpop.f32.mrf.mxu0
  %v300 = vadd.f32 %v125, %v299
  %v301 = vpop.f32.mrf.mxu0
  %v302 = vadd.f32 %v125, %v301
  %303 = vmatmul.bf16.gmra.mxu0 %v84
  %v304 = vpop.f32.mrf.mxu0
  %v305 = vadd.f32 %v125, %v304
  %v306 = vpop.f32.mrf.mxu0
  %v307 = vadd.f32 %v125, %v306
  %308 = vdwg.mxu0
  %309 = vmatpush.bf16.msra.mxu0 %v214
  %310 = vmatpush.bf16.msra.mxu0 %v213
  %311 = vmatpush.bf16.msra.mxu0 %v212
  %312 = vmatpush.bf16.msra.mxu0 %v211
  %313 = vmatpush.bf16.msra.mxu0 %v210
  %314 = vmatpush.bf16.msra.mxu0 %v209
  %315 = vmatpush.bf16.msra.mxu0 %v208
  %316 = vmatpush.bf16.msra.mxu0 %v207
  %317 = vmatmul.bf16.gmra.mxu0 %v64
  %v318 = vpop.f32.mrf.mxu0
  %v319 = vadd.f32 %v270, %v318
  %v320 = vpop.f32.mrf.mxu0
  %v321 = vadd.f32 %v272, %v320
  %322 = vmatmul.bf16.gmra.mxu0 %v67
  %v323 = vpop.f32.mrf.mxu0
  %v324 = vadd.f32 %v275, %v323
  %v325 = vpop.f32.mrf.mxu0
  %v326 = vadd.f32 %v277, %v325
  %327 = vmatmul.bf16.gmra.mxu0 %v70
  %v328 = vpop.f32.mrf.mxu0
  %v329 = vadd.f32 %v280, %v328
  %v330 = vpop.f32.mrf.mxu0
  %v331 = vadd.f32 %v282, %v330
  %332 = vmatmul.bf16.gmra.mxu0 %v73
  %v333 = vpop.f32.mrf.mxu0
  %v334 = vadd.f32 %v285, %v333
  %v335 = vpop.f32.mrf.mxu0
  %v336 = vadd.f32 %v287, %v335
  %337 = vmatmul.bf16.gmra.mxu0 %v76
  %v338 = vpop.f32.mrf.mxu0
  %v339 = vadd.f32 %v290, %v338
  %v340 = vpop.f32.mrf.mxu0
  %v341 = vadd.f32 %v292, %v340
  %342 = vmatmul.bf16.gmra.mxu0 %v79
  %v343 = vpop.f32.mrf.mxu0
  %v344 = vadd.f32 %v295, %v343
  %v345 = vpop.f32.mrf.mxu0
  %v346 = vadd.f32 %v297, %v345
  %347 = vmatmul.bf16.gmra.mxu0 %v82
  %v348 = vpop.f32.mrf.mxu0
  %v349 = vadd.f32 %v300, %v348
  %v350 = vpop.f32.mrf.mxu0
  %v351 = vadd.f32 %v302, %v350
  %352 = vmatmul.bf16.gmra.mxu0 %v85
  %v353 = vpop.f32.mrf.mxu0
  %v354 = vadd.f32 %v305, %v353
  %v355 = vpop.f32.mrf.mxu0
  %v356 = vadd.f32 %v307, %v355
  %357 = vdwg.mxu0
  %358 = vmatpush.bf16.msra.mxu0 0
  %359 = vmatpush.bf16.msra.mxu0 0
  %360 = vmatpush.bf16.msra.mxu0 0
  %361 = vmatpush.bf16.msra.mxu0 0
  %362 = vmatpush.bf16.msra.mxu0 0
  %363 = vmatpush.bf16.msra.mxu0 0
  %364 = vmatpush.bf16.msra.mxu0 %v216
  %365 = vmatpush.bf16.msra.mxu0 %v215
  %366 = vmatmul.bf16.gmra.mxu0 %v237
  %v367 = vpop.f32.mrf.mxu0
  %v368 = vadd.f32 %v319, %v367
  %v369 = vpop.f32.mrf.mxu0
  %v370 = vadd.f32 %v321, %v369
  %371 = vmatmul.bf16.gmra.mxu0 %v240
  %v372 = vpop.f32.mrf.mxu0
  %v373 = vadd.f32 %v324, %v372
  %v374 = vpop.f32.mrf.mxu0
  %v375 = vadd.f32 %v326, %v374
  %376 = vmatmul.bf16.gmra.mxu0 %v243
  %v377 = vpop.f32.mrf.mxu0
  %v378 = vadd.f32 %v329, %v377
  %v379 = vpop.f32.mrf.mxu0
  %v380 = vadd.f32 %v331, %v379
  %381 = vmatmul.bf16.gmra.mxu0 %v246
  %v382 = vpop.f32.mrf.mxu0
  %v383 = vadd.f32 %v334, %v382
  %v384 = vpop.f32.mrf.mxu0
  %v385 = vadd.f32 %v336, %v384
  %386 = vmatmul.bf16.gmra.mxu0 %v249
  %v387 = vpop.f32.mrf.mxu0
  %v388 = vadd.f32 %v339, %v387
  %v389 = vpop.f32.mrf.mxu0
  %v390 = vadd.f32 %v341, %v389
  %391 = vmatmul.bf16.gmra.mxu0 %v252
  %v392 = vpop.f32.mrf.mxu0
  %v393 = vadd.f32 %v344, %v392
  %v394 = vpop.f32.mrf.mxu0
  %v395 = vadd.f32 %v346, %v394
  %396 = vmatmul.bf16.gmra.mxu0 %v255
  %v397 = vpop.f32.mrf.mxu0
  %v398 = vadd.f32 %v349, %v397
  %v399 = vpop.f32.mrf.mxu0
  %v400 = vadd.f32 %v351, %v399
  %401 = vmatmul.bf16.gmra.mxu0 %v258
  %v402 = vpop.f32.mrf.mxu0
  %v403 = vadd.f32 %v354, %v402
  %v404 = vpop.f32.mrf.mxu0
  %v405 = vadd.f32 %v356, %v404
  %406 = vdwg.mxu0
  %v407 = vmax.f32 %v368, 0.0
  %v408 = vmax.f32 %v370, 0.0
  %v409 = vmax.f32 %v373, 0.0
  %v410 = vmax.f32 %v375, 0.0
  %v411 = vmax.f32 %v378, 0.0
  %v412 = vmax.f32 %v380, 0.0
  %v413 = vmax.f32 %v383, 0.0
  %v414 = vmax.f32 %v385, 0.0
  %v415 = vmax.f32 %v388, 0.0
  %v416 = vmax.f32 %v390, 0.0
  %v417 = vmax.f32 %v393, 0.0
  %v418 = vmax.f32 %v395, 0.0
  %v419 = vmax.f32 %v398, 0.0
  %v420 = vmax.f32 %v400, 0.0
  %v421 = vmax.f32 %v403, 0.0
  %v422 = vmax.f32 %v405, 0.0
  %423 = vst.msk [vmem:[%s3] sm:$0xff] %vm235, %v407
  %424 = vst.msk [vmem:[%s3 + $0x8] sm:$0xff] %vm235, %v408
  %425 = vst.msk [vmem:[%s3 + $0x10] sm:$0xff] %vm235, %v409
  %426 = vst.msk [vmem:[%s3 + $0x18] sm:$0xff] %vm235, %v410
  %427 = vst.msk [vmem:[%s3 + $0x20] sm:$0xff] %vm235, %v411
  %428 = vst.msk [vmem:[%s3 + $0x28] sm:$0xff] %vm235, %v412
  %429 = vst.msk [vmem:[%s3 + $0x30] sm:$0xff] %vm235, %v413
  %430 = vst.msk [vmem:[%s3 + $0x38] sm:$0xff] %vm235, %v414
  %431 = vst.msk [vmem:[%s3 + $0x40] sm:$0xff] %vm235, %v415
  %432 = vst.msk [vmem:[%s3 + $0x48] sm:$0xff] %vm235, %v416
  %433 = vst.msk [vmem:[%s3 + $0x50] sm:$0xff] %vm235, %v417
  %434 = vst.msk [vmem:[%s3 + $0x58] sm:$0xff] %vm235, %v418
  %435 = vst.msk [vmem:[%s3 + $0x60] sm:$0xff] %vm235, %v419
  %436 = vst.msk [vmem:[%s3 + $0x68] sm:$0xff] %vm235, %v420
  %437 = vst.msk [vmem:[%s3 + $0x70] sm:$0xff] %vm235, %v421
  %438 = vst.msk [vmem:[%s3 + $0x78] sm:$0xff] %vm235, %v422
  // Predicated region
  $region14: #{forward.7} parent=0 // pred_check
    _
  $region15: #{forward.7} parent=0 // pred_check_branch
    %440 = sbr.rel (0) target = $region17
  $region16: #{forward.7} parent=0 // pred_region
    _
  $region17: #{forward.7} parent=0 // pred_fallthru
    _
  // Predicated region
  $region18: #{forward.7} parent=0 // pred_check
    _
  $region19: #{forward.7} parent=0 // pred_check_branch
    %442 = sbr.rel (0) target = $region21
  $region20: #{forward.7} parent=0 // pred_region
    _
  $region21: #{forward.7} parent=0 // pred_fallthru
    _

// kernel: sub.15
$region0: #{sub.15}
  #allocation0 [shape = 's32[1]{0}', space=sflag, size = 0x4, scoped, tag = 'scoped memory for sub.15']
  %s0 = inlined_call_operand.vmem [shape: f32[16], index: 0, kind: input, shape index: {}]
  %s1 = inlined_call_operand.vmem [shape: f32[16], index: 1, kind: input, shape index: {}]
  %s2 = inlined_call_operand.vmem [shape: f32[16], index: 2, kind: output, shape index: {}]
  %v3 = vld [vmem:[%s0] sm:$0x1]
  %v4 = vld [vmem:[%s1] sm:$0x1]
  %5 = xla_tuple %v3, %v4
  %6 = xla_tuple %5
  %v7 = vsub.f32 %v3, %v4
  %8 = xla_tuple %v7
  %9 = vst [vmem:[%s2] sm:$0x1] %v7

// kernel: forward.9
$region0: #{forward.9}
  #allocation0 [shape = 'u32[]', space=smem, size = 0x4, offset = 0x4, fixed_abs, tag = 'smem constant byte address 0x4 - core index']
  #allocation1 [shape = 'u32[72,128]{1,0:T(1,128)}', space=vmem, size = 0x9000, scoped, tag = 'internal scratch']
  %s0 = inlined_call_operand.vmem [shape: f32[896,32], index: 0, kind: input, shape index: {}]
  %s1 = inlined_call_operand.vmem [shape: bf16[32,64], index: 1, kind: input, shape index: {}]
  %s2 = inlined_call_operand.vmem [shape: f32[1,64], index: 2, kind: input, shape index: {}]
  %s3 = inlined_call_operand.vmem [shape: bf16[64,128], index: 3, kind: input, shape index: {}]
  %s4 = inlined_call_operand.vmem [shape: f32[1,128], index: 4, kind: input, shape index: {}]
  %s5 = inlined_call_operand.vmem [shape: f32[16,128], index: 5, kind: output, shape index: {}]
  %s6 = sld [smem:[#allocation0]]
  $region53: #{forward.9} parent=0
    _
  %s8 = ssub.s32 1, %s6
  %s9 = scalar_select 0, %s8, %s6
  loop: start=0, step=1, limit=4
  $region2: #{forward.9} parent=0 // loop_pre_header
    _
  $region3: #{forward.9} parent=0 // loop_header
    %s11 = sphi 0, %s15
    %p12 = scmp.ge.s32.totalorder %s11, 4
    %s21 = sphi 0, %s23
    %s24 = sphi 0, %s21
    %s25 = sphi 0, %s24
    %s41 = sphi 0, %s25
    %s45 = sphi 0, %s45
    %s47 = sphi 0, %s45
    %s48 = sphi 0, %s47
    %s62 = sphi 0, %s48
    %s66 = sphi 0, %s66
    %s68 = sphi 0, %s66
    %s69 = sphi 0, %s68
    %s83 = sphi 0, %s69
    %s87 = sphi 0, %s87
    %s89 = sphi 0, %s87
    %s90 = sphi 0, %s89
    %s104 = sphi 0, %s90
    %s108 = sphi 0, %s108
    %s110 = sphi 0, %s108
    %s111 = sphi 0, %s110
    %s125 = sphi 0, %s111
    %s131 = sphi 0, %s133
    %s134 = sphi 0, %s131
    %s135 = sphi 0, %s134
    %s151 = sphi 0, %s135
  $region4: #{forward.9} parent=0 // loop_header_branch
    %14 = sbr.rel (%p12) target = $region8
  $region5: #{forward.9} parent=0 // loop_body
    %s16 = ssub.s32 %s11, 1
    %s17 = ssub.s32 %s11, 2
    %s18 = sadd.s32 %s11, 1
    %s19 = ssub.s32 %s11, %s18
    %p20 = scmp.eq.s32.totalorder %s19, 0
    %s22 = sadd.s32 %s21, 1
    %s23 = scalar_select %p20, %s21, %s22
    %p26 = pneg %p20
    %p27 = scmp.eq.s32.totalorder %s11, 1
    %p28 = por %p26, %p27
    %p29 = scmp.ne.s32.totalorder %s21, %s24
    %p30 = scmp.eq.s32.totalorder %s11, 0
    %p31 = por %p29, %p30
    %p32 = scmp.ne.s32.totalorder %s21, %s24
    %p33 = scmp.eq.s32.totalorder %s16, 1
    %p34 = por %p32, %p33
    %p35 = scmp.ne.s32.totalorder %s24, %s25
    %p36 = scmp.eq.s32.totalorder %s16, 0
    %p37 = por %p35, %p36
    %p38 = scmp.ne.s32.totalorder %s24, %s25
    %p39 = scmp.eq.s32.totalorder %s17, 1
    %p40 = por %p38, %p39
    %p42 = scmp.ne.s32.totalorder %s25, %s41
    %p43 = scmp.eq.s32.totalorder %s17, 0
    %p44 = por %p42, %p43
    %s46 = sadd.s32 %s45, 1
    %p49 = scmp.eq.s32.totalorder %s11, 1
    %p50 = scmp.ne.s32.totalorder %s45, %s47
    %p51 = scmp.eq.s32.totalorder %s11, 0
    %p52 = por %p50, %p51
    %p53 = scmp.ne.s32.totalorder %s45, %s47
    %p54 = scmp.eq.s32.totalorder %s16, 1
    %p55 = por %p53, %p54
    %p56 = scmp.ne.s32.totalorder %s47, %s48
    %p57 = scmp.eq.s32.totalorder %s16, 0
    %p58 = por %p56, %p57
    %p59 = scmp.ne.s32.totalorder %s47, %s48
    %p60 = scmp.eq.s32.totalorder %s17, 1
    %p61 = por %p59, %p60
    %p63 = scmp.ne.s32.totalorder %s48, %s62
    %p64 = scmp.eq.s32.totalorder %s17, 0
    %p65 = por %p63, %p64
    %s67 = sadd.s32 %s66, 1
    %p70 = scmp.eq.s32.totalorder %s11, 1
    %p71 = scmp.ne.s32.totalorder %s66, %s68
    %p72 = scmp.eq.s32.totalorder %s11, 0
    %p73 = por %p71, %p72
    %p74 = scmp.ne.s32.totalorder %s66, %s68
    %p75 = scmp.eq.s32.totalorder %s16, 1
    %p76 = por %p74, %p75
    %p77 = scmp.ne.s32.totalorder %s68, %s69
    %p78 = scmp.eq.s32.totalorder %s16, 0
    %p79 = por %p77, %p78
    %p80 = scmp.ne.s32.totalorder %s68, %s69
    %p81 = scmp.eq.s32.totalorder %s17, 1
    %p82 = por %p80, %p81
    %p84 = scmp.ne.s32.totalorder %s69, %s83
    %p85 = scmp.eq.s32.totalorder %s17, 0
    %p86 = por %p84, %p85
    %s88 = sadd.s32 %s87, 1
    %p91 = scmp.eq.s32.totalorder %s11, 1
    %p92 = scmp.ne.s32.totalorder %s87, %s89
    %p93 = scmp.eq.s32.totalorder %s11, 0
    %p94 = por %p92, %p93
    %p95 = scmp.ne.s32.totalorder %s87, %s89
    %p96 = scmp.eq.s32.totalorder %s16, 1
    %p97 = por %p95, %p96
    %p98 = scmp.ne.s32.totalorder %s89, %s90
    %p99 = scmp.eq.s32.totalorder %s16, 0
    %p100 = por %p98, %p99
    %p101 = scmp.ne.s32.totalorder %s89, %s90
    %p102 = scmp.eq.s32.totalorder %s17, 1
    %p103 = por %p101, %p102
    %p105 = scmp.ne.s32.totalorder %s90, %s104
    %p106 = scmp.eq.s32.totalorder %s17, 0
    %p107 = por %p105, %p106
    %s109 = sadd.s32 %s108, 1
    %p112 = scmp.eq.s32.totalorder %s11, 1
    %p113 = scmp.ne.s32.totalorder %s108, %s110
    %p114 = scmp.eq.s32.totalorder %s11, 0
    %p115 = por %p113, %p114
    %p116 = scmp.ne.s32.totalorder %s108, %s110
    %p117 = scmp.eq.s32.totalorder %s16, 1
    %p118 = por %p116, %p117
    %p119 = scmp.ne.s32.totalorder %s110, %s111
    %p120 = scmp.eq.s32.totalorder %s16, 0
    %p121 = por %p119, %p120
    %p122 = scmp.ne.s32.totalorder %s110, %s111
    %p123 = scmp.eq.s32.totalorder %s17, 1
    %p124 = por %p122, %p123
    %p126 = scmp.ne.s32.totalorder %s111, %s125
    %p127 = scmp.eq.s32.totalorder %s17, 0
    %p128 = por %p126, %p127
    %s129 = ssub.s32 %s11, %s18
    %p130 = scmp.eq.s32.totalorder %s129, 0
    %s132 = sadd.s32 %s131, 1
    %s133 = scalar_select %p130, %s131, %s132
    %p136 = pneg %p130
    %p137 = scmp.eq.s32.totalorder %s11, 1
    %p138 = por %p136, %p137
    %p139 = scmp.ne.s32.totalorder %s131, %s134
    %p140 = scmp.eq.s32.totalorder %s11, 0
    %p141 = por %p139, %p140
    %p142 = scmp.ne.s32.totalorder %s131, %s134
    %p143 = scmp.eq.s32.totalorder %s16, 1
    %p144 = por %p142, %p143
    %p145 = scmp.ne.s32.totalorder %s134, %s135
    %p146 = scmp.eq.s32.totalorder %s16, 0
    %p147 = por %p145, %p146
    %p148 = scmp.ne.s32.totalorder %s134, %s135
    %p149 = scmp.eq.s32.totalorder %s17, 1
    %p150 = por %p148, %p149
    %p152 = scmp.ne.s32.totalorder %s135, %s151
    %p153 = scmp.eq.s32.totalorder %s17, 0
    %p154 = por %p152, %p153
    %p155 = scmp.le.s32.totalorder 1, %s11
    %p156 = scmp.lt.s32.totalorder %s11, 3
    %p157 = pnand %p155, %p156
    %p158 = pneg %p157
    // Predicated region
    $region9: #{forward.9} parent=5 // pred_check
      _
    $region10: #{forward.9} parent=5 // pred_check_branch
      %160 = sbr.rel (%p157) target = $region12
    $region11: #{forward.9} parent=5 // pred_region
      %s161 = ssub.s32 %s11, 1
      // Predicated region
      $region13: #{forward.9} parent=11 // pred_check
        %p162 = pneg %p58
      $region14: #{forward.9} parent=11 // pred_check_branch
        %164 = sbr.rel (%p162) target = $region16
      $region15: #{forward.9} parent=11 // pred_region
        _
      $region16: #{forward.9} parent=11 // pred_fallthru
        _
      // Predicated region
      $region17: #{forward.9} parent=11 // pred_check
        %p165 = pneg %p79
      $region18: #{forward.9} parent=11 // pred_check_branch
        %167 = sbr.rel (%p165) target = $region20
      $region19: #{forward.9} parent=11 // pred_region
        _
      $region20: #{forward.9} parent=11 // pred_fallthru
        _
      // Predicated region
      $region21: #{forward.9} parent=11 // pred_check
        %p168 = pneg %p100
      $region22: #{forward.9} parent=11 // pred_check_branch
        %170 = sbr.rel (%p168) target = $region24
      $region23: #{forward.9} parent=11 // pred_region
        _
      $region24: #{forward.9} parent=11 // pred_fallthru
        _
      // Predicated region
      $region25: #{forward.9} parent=11 // pred_check
        %p171 = pneg %p121
      $region26: #{forward.9} parent=11 // pred_check_branch
        %173 = sbr.rel (%p171) target = $region28
      $region27: #{forward.9} parent=11 // pred_region
        _
      $region28: #{forward.9} parent=11 // pred_fallthru
        _
    $region12: #{forward.9} parent=5 // pred_fallthru
      _
    %p174 = scmp.lt.s32.totalorder %s11, 2
    // Predicated region
    $region29: #{forward.9} parent=5 // pred_check
      %p175 = pneg %p174
    $region30: #{forward.9} parent=5 // pred_check_branch
      %177 = sbr.rel (%p175) target = $region32
    $region31: #{forward.9} parent=5 // pred_region
      // Predicated region
      $region33: #{forward.9} parent=31 // pred_check
        %p178 = pneg %p31
      $region34: #{forward.9} parent=31 // pred_check_branch
        %180 = sbr.rel (%p178) target = $region36
      $region35: #{forward.9} parent=31 // pred_region
        %s181 = smul.u32 56, %s11
        %p182 = scmp.lt.s32.totalorder %s181, 111
        %s183 = scalar_select %p182, %s181, 111
        %s184 = smul.addr %s183, 8
        %s185 = scalar_lea.vmem %s0, %s184
        %s186 = smul.u32 56, %s11
      $region36: #{forward.9} parent=31 // pred_fallthru
        _
    $region32: #{forward.9} parent=5 // pred_fallthru
      _
    %p187 = scmp.le.s32.totalorder 1, %s11
    %p188 = scmp.lt.s32.totalorder %s11, 3
    %p189 = pnand %p187, %p188
    %p190 = pneg %p189
    // Predicated region
    $region37: #{forward.9} parent=5 // pred_check
      _
    $region38: #{forward.9} parent=5 // pred_check_branch
      %192 = sbr.rel (%p189) target = $region40
    $region39: #{forward.9} parent=5 // pred_region
      %s193 = ssub.s32 %s11, 1
      %s194 = smul.u32 56, %s16
      %p195 = scmp.lt.s32.totalorder %s194, 111
      %s196 = scalar_select %p195, %s194, 111
      %s197 = smul.addr %s196, 8
      %s198 = scalar_lea.vmem %s0, %s197
      %p199 = pneg %p37
      %p200 = pneg %p34
      %p201 = pneg %p58
      %p202 = pneg %p55
      %p203 = pneg %p79
      %p204 = pneg %p76
      %p205 = pneg %p100
      %p206 = pneg %p97
      %p207 = pneg %p121
      %p208 = pneg %p118
      %p209 = pneg %p147
      %p210 = pneg %p144
      %p211 = scmp.lt.s32.totalorder %s16, 1
      %s212 = scalar_select %p211, %s16, 1
      %s213 = smul.addr %s212, 8
      %s214 = scalar_lea.vmem %s5, %s213
      %s215 = smul.u32 56, %s16
      %p216 = scmp.lt.s32.totalorder %s215, 111
      %s217 = scalar_select %p216, %s215, 111
      %s218 = smul.addr %s217, 8
      %s219 = scalar_lea.vmem %s0, %s218
      %s220 = smul.u32 56, %s16
      %p221 = scmp.lt.s32.totalorder %s16, 1
      %s222 = scalar_select %p221, %s16, 1
      %s223 = smul.addr %s222, 8
      %s224 = scalar_lea.vmem %s5, %s223
      %v226 = vld [vmem:[%s219] sm:$0xff]
      %v227 = vld [vmem:[%s219 + $0x8] sm:$0xff]
      %v228 = vld [vmem:[%s219 + $0x10] sm:$0xff]
      %v229 = vld [vmem:[%s219 + $0x18] sm:$0xff]
      %v230 = vld [vmem:[%s219 + $0x20] sm:$0xff]
      %v231 = vld [vmem:[%s219 + $0x28] sm:$0xff]
      %v232 = vld [vmem:[%s219 + $0x30] sm:$0xff]
      %v233 = vld [vmem:[%s219 + $0x38] sm:$0xff]
      %v234 = vld [vmem:[%s219 + $0x40] sm:$0xff]
      %v235 = vld [vmem:[%s219 + $0x48] sm:$0xff]
      %v236 = vld [vmem:[%s219 + $0x50] sm:$0xff]
      %v237 = vld [vmem:[%s219 + $0x58] sm:$0xff]
      %v238 = vld [vmem:[%s219 + $0x60] sm:$0xff]
      %v239 = vld [vmem:[%s219 + $0x68] sm:$0xff]
      %v240 = vld [vmem:[%s219 + $0x70] sm:$0xff]
      %v241 = vld [vmem:[%s219 + $0x78] sm:$0xff]
      %v242 = vld [vmem:[%s219 + $0x80] sm:$0xff]
      %v243 = vld [vmem:[%s219 + $0x88] sm:$0xff]
      %v244 = vld [vmem:[%s219 + $0x90] sm:$0xff]
      %v245 = vld [vmem:[%s219 + $0x98] sm:$0xff]
      %v246 = vld [vmem:[%s219 + $0xa0] sm:$0xff]
      %v247 = vld [vmem:[%s219 + $0xa8] sm:$0xff]
      %v248 = vld [vmem:[%s219 + $0xb0] sm:$0xff]
      %v249 = vld [vmem:[%s219 + $0xb8] sm:$0xff]
      %v250 = vld [vmem:[%s219 + $0xc0] sm:$0xff]
      %v251 = vld [vmem:[%s219 + $0xc8] sm:$0xff]
      %v252 = vld [vmem:[%s219 + $0xd0] sm:$0xff]
      %v253 = vld [vmem:[%s219 + $0xd8] sm:$0xff]
      %v254 = vld [vmem:[%s219 + $0xe0] sm:$0xff]
      %v255 = vld [vmem:[%s219 + $0xe8] sm:$0xff]
      %v256 = vld [vmem:[%s219 + $0xf0] sm:$0xff]
      %v257 = vld [vmem:[%s219 + $0xf8] sm:$0xff]
      %v258 = vld [vmem:[%s219 + $0x100] sm:$0xff]
      %v259 = vld [vmem:[%s219 + $0x108] sm:$0xff]
      %v260 = vld [vmem:[%s219 + $0x110] sm:$0xff]
      %v261 = vld [vmem:[%s219 + $0x118] sm:$0xff]
      %v262 = vld [vmem:[%s219 + $0x120] sm:$0xff]
      %v263 = vld [vmem:[%s219 + $0x128] sm:$0xff]
      %v264 = vld [vmem:[%s219 + $0x130] sm:$0xff]
      %v265 = vld [vmem:[%s219 + $0x138] sm:$0xff]
      %v266 = vld [vmem:[%s219 + $0x140] sm:$0xff]
      %v267 = vld [vmem:[%s219 + $0x148] sm:$0xff]
      %v268 = vld [vmem:[%s219 + $0x150] sm:$0xff]
      %v269 = vld [vmem:[%s219 + $0x158] sm:$0xff]
      %v270 = vld [vmem:[%s219 + $0x160] sm:$0xff]
      %v271 = vld [vmem:[%s219 + $0x168] sm:$0xff]
      %v272 = vld [vmem:[%s219 + $0x170] sm:$0xff]
      %v273 = vld [vmem:[%s219 + $0x178] sm:$0xff]
      %v274 = vld [vmem:[%s219 + $0x180] sm:$0xff]
      %v275 = vld [vmem:[%s219 + $0x188] sm:$0xff]
      %v276 = vld [vmem:[%s219 + $0x190] sm:$0xff]
      %v277 = vld [vmem:[%s219 + $0x198] sm:$0xff]
      %v278 = vld [vmem:[%s219 + $0x1a0] sm:$0xff]
      %v279 = vld [vmem:[%s219 + $0x1a8] sm:$0xff]
      %v280 = vld [vmem:[%s219 + $0x1b0] sm:$0xff]
      %v281 = vld [vmem:[%s219 + $0x1b8] sm:$0xff]
      %v282 = vpack.c.bf16 %v227, %v226
      %v283 = vpack.c.bf16 %v229, %v228
      %v284 = vpack.c.bf16 %v231, %v230
      %v285 = vpack.c.bf16 %v233, %v232
      %v286 = vpack.c.bf16 %v235, %v234
      %v287 = vpack.c.bf16 %v237, %v236
      %v288 = vpack.c.bf16 %v239, %v238
      %v289 = vpack.c.bf16 %v241, %v240
      %v290 = vpack.c.bf16 %v243, %v242
      %v291 = vpack.c.bf16 %v245, %v244
      %v292 = vpack.c.bf16 %v247, %v246
      %v293 = vpack.c.bf16 %v249, %v248
      %v294 = vpack.c.bf16 %v251, %v250
      %v295 = vpack.c.bf16 %v253, %v252
      %v296 = vpack.c.bf16 %v255, %v254
      %v297 = vpack.c.bf16 %v257, %v256
      %v298 = vpack.c.bf16 %v259, %v258
      %v299 = vpack.c.bf16 %v261, %v260
      %v300 = vpack.c.bf16 %v263, %v262
      %v301 = vpack.c.bf16 %v265, %v264
      %v302 = vpack.c.bf16 %v267, %v266
      %v303 = vpack.c.bf16 %v269, %v268
      %v304 = vpack.c.bf16 %v271, %v270
      %v305 = vpack.c.bf16 %v273, %v272
      %v306 = vpack.c.bf16 %v275, %v274
      %v307 = vpack.c.bf16 %v277, %v276
      %v308 = vpack.c.bf16 %v279, %v278
      %v309 = vpack.c.bf16 %v281, %v280
      %v310 = vld [vmem:[%s1] sm:$0xf]
      %v311 = vld [vmem:[%s1 + $0x4] sm:$0xf]
      %v312 = vld [vmem:[%s1 + $0x8] sm:$0xf]
      %v313 = vld [vmem:[%s1 + $0xc] sm:$0xf]
      %v314 = vld [vmem:[%s2] sm:$0x1]
      %v316 = vperm.slane %v314, 0
      %v322 = vunpack.c.l.b16 %v310
      %v323 = vunpack.c.l.b16 %v311
      %v324 = vunpack.c.l.b16 %v312
      %v325 = vunpack.c.l.b16 %v313
      %v326 = vpack.c.b16 %v323, %v322
      %v327 = vpack.c.b16 %v325, %v324
      %vm330 = vcmask 261120
      %v332 = vsel %vm330, %v282, 0
      %v335 = vsel %vm330, %v283, 0
      %v338 = vsel %vm330, %v284, 0
      %v341 = vsel %vm330, %v285, 0
      %v344 = vsel %vm330, %v286, 0
      %v347 = vsel %vm330, %v287, 0
      %v350 = vsel %vm330, %v288, 0
      %v353 = vsel %vm330, %v289, 0
      %v356 = vsel %vm330, %v290, 0
      %v359 = vsel %vm330, %v291, 0
      %v362 = vsel %vm330, %v292, 0
      %v365 = vsel %vm330, %v293, 0
      %v368 = vsel %vm330, %v294, 0
      %v371 = vsel %vm330, %v295, 0
      %v374 = vsel %vm330, %v296, 0
      %v377 = vsel %vm330, %v297, 0
      %v380 = vsel %vm330, %v298, 0
      %v383 = vsel %vm330, %v299, 0
      %v386 = vsel %vm330, %v300, 0
      %v389 = vsel %vm330, %v301, 0
      %v392 = vsel %vm330, %v302, 0
      %v395 = vsel %vm330, %v303, 0
      %v398 = vsel %vm330, %v304, 0
      %v401 = vsel %vm330, %v305, 0
      %v404 = vsel %vm330, %v306, 0
      %v407 = vsel %vm330, %v307, 0
      %v410 = vsel %vm330, %v308, 0
      %v413 = vsel %vm330, %v309, 0
      %415 = vmatpush.bf16.msra.mxu0 0
      %416 = vmatpush.bf16.msra.mxu0 0
      %417 = vmatpush.bf16.msra.mxu0 0
      %418 = vmatpush.bf16.msra.mxu0 0
      %419 = vmatpush.bf16.msra.mxu0 0
      %420 = vmatpush.bf16.msra.mxu0 0
      %421 = vmatpush.bf16.msra.mxu0 %v327
      %422 = vmatpush.bf16.msra.mxu0 %v326
      %423 = vmatmul.bf16.gmra.mxu0 %v332
      %v424 = vpop.f32.mrf.mxu0
      %v425 = vadd.f32 %v316, %v424
      %v426 = vpop.f32.mrf.mxu0
      %v427 = vadd.f32 %v316, %v426
      %428 = vmatmul.bf16.gmra.mxu0 %v335
      %v429 = vpop.f32.mrf.mxu0
      %v430 = vadd.f32 %v316, %v429
      %v431 = vpop.f32.mrf.mxu0
      %v432 = vadd.f32 %v316, %v431
      %433 = vmatmul.bf16.gmra.mxu0 %v338
      %v434 = vpop.f32.mrf.mxu0
      %v435 = vadd.f32 %v316, %v434
      %v436 = vpop.f32.mrf.mxu0
      %v437 = vadd.f32 %v316, %v436
      %438 = vmatmul.bf16.gmra.mxu0 %v341
      %v439 = vpop.f32.mrf.mxu0
      %v440 = vadd.f32 %v316, %v439
      %v441 = vpop.f32.mrf.mxu0
      %v442 = vadd.f32 %v316, %v441
      %443 = vmatmul.bf16.gmra.mxu0 %v344
      %v444 = vpop.f32.mrf.mxu0
      %v445 = vadd.f32 %v316, %v444
      %v446 = vpop.f32.mrf.mxu0
      %v447 = vadd.f32 %v316, %v446
      %448 = vmatmul.bf16.gmra.mxu0 %v347
      %v449 = vpop.f32.mrf.mxu0
      %v450 = vadd.f32 %v316, %v449
      %v451 = vpop.f32.mrf.mxu0
      %v452 = vadd.f32 %v316, %v451
      %453 = vmatmul.bf16.gmra.mxu0 %v350
      %v454 = vpop.f32.mrf.mxu0
      %v455 = vadd.f32 %v316, %v454
      %v456 = vpop.f32.mrf.mxu0
      %v457 = vadd.f32 %v316, %v456
      %458 = vmatmul.bf16.gmra.mxu0 %v353
      %v459 = vpop.f32.mrf.mxu0
      %v460 = vadd.f32 %v316, %v459
      %v461 = vpop.f32.mrf.mxu0
      %v462 = vadd.f32 %v316, %v461
      %463 = vmatmul.bf16.gmra.mxu0 %v356
      %v464 = vpop.f32.mrf.mxu0
      %v465 = vadd.f32 %v316, %v464
      %v466 = vpop.f32.mrf.mxu0
      %v467 = vadd.f32 %v316, %v466
      %468 = vmatmul.bf16.gmra.mxu0 %v359
      %v469 = vpop.f32.mrf.mxu0
      %v470 = vadd.f32 %v316, %v469
      %v471 = vpop.f32.mrf.mxu0
      %v472 = vadd.f32 %v316, %v471
      %473 = vmatmul.bf16.gmra.mxu0 %v362
      %v474 = vpop.f32.mrf.mxu0
      %v475 = vadd.f32 %v316, %v474
      %v476 = vpop.f32.mrf.mxu0
      %v477 = vadd.f32 %v316, %v476
      %478 = vmatmul.bf16.gmra.mxu0 %v365
      %v479 = vpop.f32.mrf.mxu0
      %v480 = vadd.f32 %v316, %v479
      %v481 = vpop.f32.mrf.mxu0
      %v482 = vadd.f32 %v316, %v481
      %483 = vmatmul.bf16.gmra.mxu0 %v368
      %v484 = vpop.f32.mrf.mxu0
      %v485 = vadd.f32 %v316, %v484
      %v486 = vpop.f32.mrf.mxu0
      %v487 = vadd.f32 %v316, %v486
      %488 = vmatmul.bf16.gmra.mxu0 %v371
      %v489 = vpop.f32.mrf.mxu0
      %v490 = vadd.f32 %v316, %v489
      %v491 = vpop.f32.mrf.mxu0
      %v492 = vadd.f32 %v316, %v491
      %493 = vmatmul.bf16.gmra.mxu0 %v374
      %v494 = vpop.f32.mrf.mxu0
      %v495 = vadd.f32 %v316, %v494
      %v496 = vpop.f32.mrf.mxu0
      %v497 = vadd.f32 %v316, %v496
      %498 = vmatmul.bf16.gmra.mxu0 %v377
      %v499 = vpop.f32.mrf.mxu0
      %v500 = vadd.f32 %v316, %v499
      %v501 = vpop.f32.mrf.mxu0
      %v502 = vadd.f32 %v316, %v501
      %503 = vmatmul.bf16.gmra.mxu0 %v380
      %v504 = vpop.f32.mrf.mxu0
      %v505 = vadd.f32 %v316, %v504
      %v506 = vpop.f32.mrf.mxu0
      %v507 = vadd.f32 %v316, %v506
      %508 = vmatmul.bf16.gmra.mxu0 %v383
      %v509 = vpop.f32.mrf.mxu0
      %v510 = vadd.f32 %v316, %v509
      %v511 = vpop.f32.mrf.mxu0
      %v512 = vadd.f32 %v316, %v511
      %513 = vmatmul.bf16.gmra.mxu0 %v386
      %v514 = vpop.f32.mrf.mxu0
      %v515 = vadd.f32 %v316, %v514
      %v516 = vpop.f32.mrf.mxu0
      %v517 = vadd.f32 %v316, %v516
      %518 = vmatmul.bf16.gmra.mxu0 %v389
      %v519 = vpop.f32.mrf.mxu0
      %v520 = vadd.f32 %v316, %v519
      %v521 = vpop.f32.mrf.mxu0
      %v522 = vadd.f32 %v316, %v521
      %523 = vmatmul.bf16.gmra.mxu0 %v392
      %v524 = vpop.f32.mrf.mxu0
      %v525 = vadd.f32 %v316, %v524
      %v526 = vpop.f32.mrf.mxu0
      %v527 = vadd.f32 %v316, %v526
      %528 = vmatmul.bf16.gmra.mxu0 %v395
      %v529 = vpop.f32.mrf.mxu0
      %v530 = vadd.f32 %v316, %v529
      %v531 = vpop.f32.mrf.mxu0
      %v532 = vadd.f32 %v316, %v531
      %533 = vmatmul.bf16.gmra.mxu0 %v398
      %v534 = vpop.f32.mrf.mxu0
      %v535 = vadd.f32 %v316, %v534
      %v536 = vpop.f32.mrf.mxu0
      %v537 = vadd.f32 %v316, %v536
      %538 = vmatmul.bf16.gmra.mxu0 %v401
      %v539 = vpop.f32.mrf.mxu0
      %v540 = vadd.f32 %v316, %v539
      %v541 = vpop.f32.mrf.mxu0
      %v542 = vadd.f32 %v316, %v541
      %543 = vmatmul.bf16.gmra.mxu0 %v404
      %v544 = vpop.f32.mrf.mxu0
      %v545 = vadd.f32 %v316, %v544
      %v546 = vpop.f32.mrf.mxu0
      %v547 = vadd.f32 %v316, %v546
      %548 = vmatmul.bf16.gmra.mxu0 %v407
      %v549 = vpop.f32.mrf.mxu0
      %v550 = vadd.f32 %v316, %v549
      %v551 = vpop.f32.mrf.mxu0
      %v552 = vadd.f32 %v316, %v551
      %553 = vmatmul.bf16.gmra.mxu0 %v410
      %v554 = vpop.f32.mrf.mxu0
      %v555 = vadd.f32 %v316, %v554
      %v556 = vpop.f32.mrf.mxu0
      %v557 = vadd.f32 %v316, %v556
      %558 = vmatmul.bf16.gmra.mxu0 %v413
      %v559 = vpop.f32.mrf.mxu0
      %v560 = vadd.f32 %v316, %v559
      %v561 = vpop.f32.mrf.mxu0
      %v562 = vadd.f32 %v316, %v561
      %563 = vdwg.mxu0
      %v564 = vmax.f32 %v425, 0.0
      %v565 = vmax.f32 %v427, 0.0
      %v566 = vmax.f32 %v430, 0.0
      %v567 = vmax.f32 %v432, 0.0
      %v568 = vmax.f32 %v435, 0.0
      %v569 = vmax.f32 %v437, 0.0
      %v570 = vmax.f32 %v440, 0.0
      %v571 = vmax.f32 %v442, 0.0
      %v572 = vmax.f32 %v445, 0.0
      %v573 = vmax.f32 %v447, 0.0
      %v574 = vmax.f32 %v450, 0.0
      %v575 = vmax.f32 %v452, 0.0
      %v576 = vmax.f32 %v455, 0.0
      %v577 = vmax.f32 %v457, 0.0
      %v578 = vmax.f32 %v460, 0.0
      %v579 = vmax.f32 %v462, 0.0
      %v580 = vmax.f32 %v465, 0.0
      %v581 = vmax.f32 %v467, 0.0
      %v582 = vmax.f32 %v470, 0.0
      %v583 = vmax.f32 %v472, 0.0
      %v584 = vmax.f32 %v475, 0.0
      %v585 = vmax.f32 %v477, 0.0
      %v586 = vmax.f32 %v480, 0.0
      %v587 = vmax.f32 %v482, 0.0
      %v588 = vmax.f32 %v485, 0.0
      %v589 = vmax.f32 %v487, 0.0
      %v590 = vmax.f32 %v490, 0.0
      %v591 = vmax.f32 %v492, 0.0
      %v592 = vmax.f32 %v495, 0.0
      %v593 = vmax.f32 %v497, 0.0
      %v594 = vmax.f32 %v500, 0.0
      %v595 = vmax.f32 %v502, 0.0
      %v596 = vmax.f32 %v505, 0.0
      %v597 = vmax.f32 %v507, 0.0
      %v598 = vmax.f32 %v510, 0.0
      %v599 = vmax.f32 %v512, 0.0
      %v600 = vmax.f32 %v515, 0.0
      %v601 = vmax.f32 %v517, 0.0
      %v602 = vmax.f32 %v520, 0.0
      %v603 = vmax.f32 %v522, 0.0
      %v604 = vmax.f32 %v525, 0.0
      %v605 = vmax.f32 %v527, 0.0
      %v606 = vmax.f32 %v530, 0.0
      %v607 = vmax.f32 %v532, 0.0
      %v608 = vmax.f32 %v535, 0.0
      %v609 = vmax.f32 %v537, 0.0
      %v610 = vmax.f32 %v540, 0.0
      %v611 = vmax.f32 %v542, 0.0
      %v612 = vmax.f32 %v545, 0.0
      %v613 = vmax.f32 %v547, 0.0
      %v614 = vmax.f32 %v550, 0.0
      %v615 = vmax.f32 %v552, 0.0
      %v616 = vmax.f32 %v555, 0.0
      %v617 = vmax.f32 %v557, 0.0
      %v618 = vmax.f32 %v560, 0.0
      %v619 = vmax.f32 %v562, 0.0
      %v620 = vlaneseq
      %v621 = vshrl.u32 %v620, 7
      %v622 = vlaneseq
      %v623 = vand.u32 %v622, 127
      %v624 = vadd.s32 %v623, 128
      %v625 = vadd.s32 %v623, 256
      %v626 = vadd.s32 %v623, 384
      %v627 = vmul.u32 %v621, 56
      %v628 = vsub.s32 %v623, %v627
      %v629 = vsub.s32 %v624, %v627
      %v630 = vsub.s32 %v625, %v627
      %v631 = vsub.s32 %v626, %v627
      %vm632 = vcmp.ge.s32.totalorder %v628, 0
      %vm633 = vcmp.ge.s32.totalorder %v629, 0
      %vm634 = vcmp.ge.s32.totalorder %v630, 0
      %vm635 = vcmp.ge.s32.totalorder %v631, 0
      %vm636 = vcmp.lt.s32.totalorder %v628, 49
      %vm637 = vcmp.lt.s32.totalorder %v629, 49
      %vm638 = vcmp.lt.s32.totalorder %v630, 49
      %vm639 = vcmp.lt.s32.totalorder %v631, 49
      %vm640 = vmand %vm632, %vm636
      %vm641 = vmand %vm633, %vm637
      %vm642 = vmand %vm634, %vm638
      %vm643 = vmand %vm635, %vm639
      %v644 = vsel %vm640, 0.020408163, 0.0
      %v645 = vsel %vm641, 0.020408163, 0.0
      %v646 = vsel %vm642, 0.020408163, 0.0
      %v647 = vsel %vm643, 0.020408163, 0.0
      %vm648 = vcmask 523264
      %v650 = vsel %vm648, %v647, 0
      %652 = vmatpush.msra.mxu0 %v579
      %653 = vmatpush.msra.mxu0 %v578
      %654 = vmatpush.msra.mxu0 %v577
      %655 = vmatpush.msra.mxu0 %v576
      %656 = vmatpush.msra.mxu0 %v575
      %657 = vmatpush.msra.mxu0 %v574
      %658 = vmatpush.msra.mxu0 %v573
      %659 = vmatpush.msra.mxu0 %v572
      %660 = vmatpush.msra.mxu0 %v571
      %661 = vmatpush.msra.mxu0 %v570
      %662 = vmatpush.msra.mxu0 %v569
      %663 = vmatpush.msra.mxu0 %v568
      %664 = vmatpush.msra.mxu0 %v567
      %665 = vmatpush.msra.mxu0 %v566
      %666 = vmatpush.msra.mxu0 %v565
      %667 = vmatpush.msra.mxu0 %v564
      %668 = vmatmul.f32.gmra.mxu0 %v644
      %v669 = vpop.f32.mrf.mxu0
      %v670 = vadd.f32 0.0, %v669
      %671 = vdwg.mxu0
      %672 = vmatpush.msra.mxu0 %v595
      %673 = vmatpush.msra.mxu0 %v594
      %674 = vmatpush.msra.mxu0 %v593
      %675 = vmatpush.msra.mxu0 %v592
      %676 = vmatpush.msra.mxu0 %v591
      %677 = vmatpush.msra.mxu0 %v590
      %678 = vmatpush.msra.mxu0 %v589
      %679 = vmatpush.msra.mxu0 %v588
      %680 = vmatpush.msra.mxu0 %v587
      %681 = vmatpush.msra.mxu0 %v586
      %682 = vmatpush.msra.mxu0 %v585
      %683 = vmatpush.msra.mxu0 %v584
      %684 = vmatpush.msra.mxu0 %v583
      %685 = vmatpush.msra.mxu0 %v582
      %686 = vmatpush.msra.mxu0 %v581
      %687 = vmatpush.msra.mxu0 %v580
      %688 = vmatmul.f32.gmra.mxu0 %v645
      %v689 = vpop.f32.mrf.mxu0
      %v690 = vadd.f32 %v670, %v689
      %691 = vdwg.mxu0
      %692 = vmatpush.msra.mxu0 %v611
      %693 = vmatpush.msra.mxu0 %v610
      %694 = vmatpush.msra.mxu0 %v609
      %695 = vmatpush.msra.mxu0 %v608
      %696 = vmatpush.msra.mxu0 %v607
      %697 = vmatpush.msra.mxu0 %v606
      %698 = vmatpush.msra.mxu0 %v605
      %699 = vmatpush.msra.mxu0 %v604
      %700 = vmatpush.msra.mxu0 %v603
      %701 = vmatpush.msra.mxu0 %v602
      %702 = vmatpush.msra.mxu0 %v601
      %703 = vmatpush.msra.mxu0 %v600
      %704 = vmatpush.msra.mxu0 %v599
      %705 = vmatpush.msra.mxu0 %v598
      %706 = vmatpush.msra.mxu0 %v597
      %707 = vmatpush.msra.mxu0 %v596
      %708 = vmatmul.f32.gmra.mxu0 %v646
      %v709 = vpop.f32.mrf.mxu0
      %v710 = vadd.f32 %v690, %v709
      %711 = vdwg.mxu0
      %712 = vmatpush.msra.mxu0 0.0
      %713 = vmatpush.msra.mxu0 0.0
      %714 = vmatpush.msra.mxu0 0.0
      %715 = vmatpush.msra.mxu0 0.0
      %716 = vmatpush.msra.mxu0 0.0
      %717 = vmatpush.msra.mxu0 0.0
      %718 = vmatpush.msra.mxu0 0.0
      %719 = vmatpush.msra.mxu0 0.0
      %720 = vmatpush.msra.mxu0 %v619
      %721 = vmatpush.msra.mxu0 %v618
      %722 = vmatpush.msra.mxu0 %v617
      %723 = vmatpush.msra.mxu0 %v616
      %724 = vmatpush.msra.mxu0 %v615
      %725 = vmatpush.msra.mxu0 %v614
      %726 = vmatpush.msra.mxu0 %v613
      %727 = vmatpush.msra.mxu0 %v612
      %728 = vmatmul.f32.gmra.mxu0 %v650
      %v729 = vpop.f32.mrf.mxu0
      %v730 = vadd.f32 %v710, %v729
      %731 = vdwg.mxu0
      %v732 = vpack.c.bf16 %v730, %v730
      %v733 = vld [vmem:[%s3] sm:$0xf]
      %v734 = vld [vmem:[%s3 + $0x4] sm:$0xf]
      %v735 = vld [vmem:[%s3 + $0x8] sm:$0xf]
      %v736 = vld [vmem:[%s3 + $0xc] sm:$0xf]
      %v737 = vld [vmem:[%s3 + $0x10] sm:$0xf]
      %v738 = vld [vmem:[%s3 + $0x14] sm:$0xf]
      %v739 = vld [vmem:[%s3 + $0x18] sm:$0xf]
      %v740 = vld [vmem:[%s3 + $0x1c] sm:$0xf]
      %v741 = vld [vmem:[%s4] sm:$0x1]
      %v743 = vperm.slane %v741, 0
      %v753 = vunpack.c.l.b16 %v733
      %v754 = vunpack.c.l.b16 %v734
      %v755 = vunpack.c.l.b16 %v735
      %v756 = vunpack.c.l.b16 %v736
      %v757 = vunpack.c.l.b16 %v737
      %v758 = vunpack.c.l.b16 %v738
      %v759 = vunpack.c.l.b16 %v739
      %v760 = vunpack.c.l.b16 %v740
      %v761 = vpack.c.b16 %v754, %v753
      %v762 = vpack.c.b16 %v756, %v755
      %v763 = vpack.c.b16 %v758, %v757
      %v764 = vpack.c.b16 %v760, %v759
      %v770 = vsel %vm648, %v732, 0
      %772 = vmatpush.bf16.msra.mxu0 0
      %773 = vmatpush.bf16.msra.mxu0 0
      %774 = vmatpush.bf16.msra.mxu0 0
      %775 = vmatpush.bf16.msra.mxu0 0
      %776 = vmatpush.bf16.msra.mxu0 %v764
      %777 = vmatpush.bf16.msra.mxu0 %v763
      %778 = vmatpush.bf16.msra.mxu0 %v762
      %779 = vmatpush.bf16.msra.mxu0 %v761
      %780 = vmatmul.bf16.gmra.mxu0 %v770
      %v781 = vpop.f32.mrf.mxu0
      %v782 = vadd.f32 %v743, %v781
      %v783 = vpop.f32.mrf.mxu0
      %784 = vdwg.mxu0
      %785 = vst [vmem:[%s224] sm:$0xff] %v782
      %p786 = scmp.lt.s32.totalorder %s16, 1
      %s787 = scalar_select %p786, %s16, 1
      %s788 = smul.addr %s787, 8
      %s789 = scalar_lea.vmem %s5, %s788
      // Predicated region
      $region41: #{forward.9} parent=39 // pred_check
        %p790 = pneg %p144
      $region42: #{forward.9} parent=39 // pred_check_branch
        %792 = sbr.rel (%p790) target = $region44
      $region43: #{forward.9} parent=39 // pred_region
        _
      $region44: #{forward.9} parent=39 // pred_fallthru
        _
    $region40: #{forward.9} parent=5 // pred_fallthru
      _
    %p793 = scmp.le.s32.totalorder 2, %s11
    // Predicated region
    $region45: #{forward.9} parent=5 // pred_check
      %p794 = pneg %p793
    $region46: #{forward.9} parent=5 // pred_check_branch
      %796 = sbr.rel (%p794) target = $region48
    $region47: #{forward.9} parent=5 // pred_region
      %s797 = ssub.s32 %s11, 2
      // Predicated region
      $region49: #{forward.9} parent=47 // pred_check
        %p798 = pneg %p150
      $region50: #{forward.9} parent=47 // pred_check_branch
        %800 = sbr.rel (%p798) target = $region52
      $region51: #{forward.9} parent=47 // pred_region
        %p801 = scmp.lt.s32.totalorder %s17, 1
        %s802 = scalar_select %p801, %s17, 1
        %s803 = smul.addr %s802, 8
        %s804 = scalar_lea.vmem %s5, %s803
      $region52: #{forward.9} parent=47 // pred_fallthru
        _
    $region48: #{forward.9} parent=5 // pred_fallthru
      _
  $region6: #{forward.9} parent=0 // loop_footer
    %s15 = sadd.s32 1, %s11
  $region7: #{forward.9} parent=0 // loop_footer_branch
    %10 = sbr.rel target = $region3
  $region8: #{forward.9} parent=0 // loop_exit
    _

</llo_original>
